<compile_context>
chip_gen: v7x
topology: tpu7x:2x2x1
jax: 0.10.0
libtpu: 0.0.40
codegen_flags: <defaults>
</compile_context>

<pallas_src>
import functools

import jax
import jax.numpy as jnp
from jax.experimental import pallas as pl
from jax.experimental.pallas import tpu as pltpu


def _attention_kernel(x_ref, wqkv_ref, wo_ref, bo_ref, o_ref, *, heads, head_dim):
    # x_ref:    (block_b, N, dim)   batch-row block
    # wqkv_ref: (dim, 3*inner)      fused QKV weights (Wq columns pre-scaled)
    # wo_ref:   (inner, dim)        output projection weights
    # bo_ref:   (1, dim)            output projection bias
    # o_ref:    (block_b, N, dim)   output block
    bblk, n, dim = x_ref.shape
    inner = head_dim
    d = inner // heads
    dt = x_ref.dtype

    # Fold batch rows into the MXU M dimension for the projection matmuls.
    x2 = x_ref[...].reshape(bblk * n, dim)                       # (M, dim)

    # Fused QKV projection: one lane-dense (M, 3*inner) matmul, f32 accumulation.
    qkv = jnp.dot(x2, wqkv_ref[...], preferred_element_type=jnp.float32)
    q = qkv[:, 0 * inner:1 * inner].reshape(bblk, n, inner).astype(dt)
    k = qkv[:, 1 * inner:2 * inner].reshape(bblk, n, inner).astype(dt)
    v = qkv[:, 2 * inner:3 * inner].reshape(bblk, n, inner).astype(dt)

    # Per-head attention (heads is static -> unrolled). Batched einsums keep the
    # batch-row block as the leading batch dim; softmax statistics stay in f32.
    # The softmax scale was folded into Wq in the wrapper.
    ctx_heads = []
    for h in range(heads):
        sl = slice(h * d, (h + 1) * d)
        s = jnp.einsum('bnd,bmd->bnm', q[..., sl], k[..., sl],
                       preferred_element_type=jnp.float32)      # (bblk, n, n)
        m = jnp.max(s, axis=-1, keepdims=True)
        p = jnp.exp(s - m)
        inv = pl.reciprocal(jnp.sum(p, axis=-1, keepdims=True), approx=True)
        attn = (p * inv).astype(dt)
        ctx_heads.append(
            jnp.einsum('bnm,bmd->bnd', attn, v[..., sl],
                       preferred_element_type=jnp.float32).astype(dt))

    # 'b h n d -> b n (h d)' and fused output projection as a single matmul.
    ctx = jnp.concatenate(ctx_heads, axis=-1).reshape(bblk * n, inner)
    y = jnp.dot(ctx, wo_ref[...], preferred_element_type=jnp.float32)
    y = y + bo_ref[...].astype(jnp.float32)                      # broadcast (1, dim)
    o_ref[...] = y.reshape(bblk, n, dim).astype(o_ref.dtype)

    # TODO(synk): for long sequences, tile N and stream K/V with an online
    # (flash-style) softmax instead of materializing full (N, N) score tiles —
    # required on v7x (64 MiB VMEM) roughly 2x earlier than on v5e/v6e.


def _pick_block_b(batch, seq, target_rows=256):
    """Pick batch rows per grid step: fill the MXU M dim (~256) but keep >=2
    grid steps so v7x's second TensorCore gets work on the 'parallel' axis."""
    bblk = max(1, min(batch, target_rows // max(1, seq)))
    if batch // bblk < 2:
        bblk = max(1, batch // 2)
    while batch % bblk:          # exact tiling (no partial blocks)
        bblk -= 1
    return bblk


def attention_forward(x, w_qkv, w_out, b_out, *, heads, head_dim, block_b=None):
    """Attention(dim, head_num=heads, head_dim=head_dim)(x), x: [B, N, dim].

    Implements the project_out=True path (true for the module defaults).
    """
    B, N, dim = x.shape
    inner = head_dim
    assert w_qkv.shape == (dim, 3 * inner)
    assert inner % heads == 0
    scale = float(head_dim) ** -0.5        # module quirk: head_dim**-0.5, not d**-0.5

    # Fold the softmax scale into the Q projection columns (done once, removes
    # the O(N^2) scale multiply from the kernel).
    wq_scaled = w_qkv[:, :inner] * jnp.asarray(scale, dtype=w_qkv.dtype)
    w_qkv_scaled = jnp.concatenate([wq_scaled, w_qkv[:, inner:]], axis=1)
    bo = b_out.reshape(1, dim)

    if block_b is None:
        block_b = _pick_block_b(B, N)
    grid = (B // block_b,)

    itemsize = x.dtype.itemsize
    flops = (2 * B * N * dim * 3 * inner            # fused QKV projection
             + 4 * B * N * N * inner                # q@k^T and attn@v over all heads
             + 2 * B * N * inner * dim)             # output projection
    # Weights/bias fetched exactly once (constant index_map), x and out once each.
    cost = pl.CostEstimate(
        flops=int(flops),
        transcendentals=int(B * heads * N * N),
        bytes_accessed=int((x.size + w_qkv.size + w_out.size + b_out.size
                            + B * N * dim) * itemsize))

    kernel = functools.partial(_attention_kernel, heads=heads, head_dim=head_dim)

    out = pl.pallas_call(
        kernel,
        out_shape=jax.ShapeDtypeStruct((B, N, dim), x.dtype),
        grid_spec=pltpu.PrefetchScalarGridSpec(
            num_scalar_prefetch=0,
            grid=grid,
            in_specs=[
                pl.BlockSpec((block_b, N, dim), lambda i: (i, 0, 0)),   # x
                pl.BlockSpec((dim, 3 * inner), lambda i: (0, 0)),       # W_qkv (resident)
                pl.BlockSpec((inner, dim), lambda i: (0, 0)),           # W_out (resident)
                pl.BlockSpec((1, dim), lambda i: (0, 0)),               # b_out (resident)
            ],
            out_specs=pl.BlockSpec((block_b, N, dim), lambda i: (i, 0, 0)),
        ),
        compiler_params=pltpu.CompilerParams(
            dimension_semantics=("parallel",),
            vmem_limit_bytes=32 * 1024 * 1024),     # well inside v7x's 64 MiB VMEM
        cost_estimate=cost,
    )(x, w_qkv_scaled, w_out, bo)
    return out


def _reference(x, w_qkv, w_out, b_out, *, heads, head_dim):
    B, N, dim = x.shape
    inner = head_dim
    d = inner // heads
    scale = float(head_dim) ** -0.5
    qkv = x.astype(jnp.float32) @ w_qkv.astype(jnp.float32)
    q, k, v = jnp.split(qkv, 3, axis=-1)

    def split_heads(t):
        return t.reshape(B, N, heads, d).transpose(0, 2, 1, 3)

    q, k, v = split_heads(q), split_heads(k), split_heads(v)
    dots = jnp.einsum('bhnd,bhmd->bhnm', q, k) * scale
    attn = jax.nn.softmax(dots, axis=-1)
    out = jnp.einsum('bhnm,bhmd->bhnd', attn, v)
    out = out.transpose(0, 2, 1, 3).reshape(B, N, inner)
    return (out @ w_out.astype(jnp.float32)
            + b_out.astype(jnp.float32)).astype(x.dtype)


if __name__ == "__main__":
    key = jax.random.PRNGKey(0)
    B, N, DIM = 2, 16, 128          # dim multiple of 128 -> lane-dense output
    HEADS, HEAD_DIM = 8, 64         # module defaults; inner_dim = head_dim = 64
    INNER = HEAD_DIM

    kx, kqkv, kwo, kbo = jax.random.split(key, 4)
    x = jax.random.normal(kx, (B, N, DIM), dtype=jnp.float32)
    w_qkv = jax.random.normal(kqkv, (DIM, 3 * INNER), dtype=jnp.float32) / jnp.sqrt(DIM)
    w_out = jax.random.normal(kwo, (INNER, DIM), dtype=jnp.float32) / jnp.sqrt(INNER)
    b_out = 0.1 * jax.random.normal(kbo, (DIM,), dtype=jnp.float32)

    out = attention_forward(x, w_qkv, w_out, b_out, heads=HEADS, head_dim=HEAD_DIM)
    out = jax.block_until_ready(out)

    ref = _reference(x, w_qkv, w_out, b_out, heads=HEADS, head_dim=HEAD_DIM)
    assert out.shape == (B, N, DIM)
    # Tolerance loosened slightly vs exact f32: softmax denominator uses the
    # EUP approximate reciprocal (pl.reciprocal(..., approx=True)).
    assert jnp.allclose(out, ref, atol=5e-3, rtol=5e-3), "mismatch vs reference"

    # TODO(synk): nn.Dropout(p=0.0) is identity in eval mode; stochastic dropout
    # (pltpu.prng_* + mask) is not implemented here.
    # TODO(synk): the project_out=False (nn.Identity) branch of the module is not
    # exercised by the default configuration and is not implemented.
    print("KERNEL_OK")
</pallas_src>

<mosaic_0001>
module attributes {stable_mosaic.version = 11 : i64} {
  func.func @_attention_kernel(%arg0: i32, %arg1: memref<1x16x128xf32, #tpu.memory_space<vmem>>, %arg2: memref<128x192xf32, #tpu.memory_space<vmem>>, %arg3: memref<64x128xf32, #tpu.memory_space<vmem>>, %arg4: memref<1x128xf32, #tpu.memory_space<vmem>>, %arg5: memref<1x16x128xf32, #tpu.memory_space<vmem>>) attributes {dimension_semantics = [#tpu.dimension_semantics<parallel>], iteration_bounds = array<i64: 2>, scalar_prefetch = 0 : i64, scratch_operands = 0 : i64, tpu.core_type = #tpu.core_type<tc>, window_params = [{transform_indices = @transform_0, window_bounds = array<i64: 1, 16, 128>}, {pipeline_mode = #tpu.pipeline_mode<synchronous>, transform_indices = @transform_1, window_bounds = array<i64: 128, 192>}, {pipeline_mode = #tpu.pipeline_mode<synchronous>, transform_indices = @transform_2, window_bounds = array<i64: 64, 128>}, {pipeline_mode = #tpu.pipeline_mode<synchronous>, transform_indices = @transform_3, window_bounds = array<i64: 1, 128>}, {transform_indices = @transform_4, window_bounds = array<i64: 1, 16, 128>}]} {
    %c0 = arith.constant 0 : index
    %c0_0 = arith.constant 0 : index
    %c0_1 = arith.constant 0 : index
    %0 = vector.load %arg1[%c0, %c0_0, %c0_1] : memref<1x16x128xf32, #tpu.memory_space<vmem>>, vector<1x16x128xf32>
    %1 = vector.shape_cast %0 : vector<1x16x128xf32> to vector<16x128xf32>
    %c0_2 = arith.constant 0 : index
    %c0_3 = arith.constant 0 : index
    %2 = vector.load %arg2[%c0_2, %c0_3] : memref<128x192xf32, #tpu.memory_space<vmem>>, vector<128x192xf32>
    %cst = arith.constant dense<0.000000e+00> : vector<16x192xf32>
    %3 = tpu.matmul %1, %2, %cst {dimension_numbers = #tpu.dot_dimension_numbers<[1], [0], [0], [1], [0, 0, 1, 1], [], []>} : vector<16x128xf32>, vector<128x192xf32>, vector<16x192xf32> -> vector<16x192xf32>
    %4 = vector.extract_strided_slice %3 {offsets = [0, 0], sizes = [16, 64], strides = [1, 1]} : vector<16x192xf32> to vector<16x64xf32>
    %5 = vector.shape_cast %4 : vector<16x64xf32> to vector<1x16x64xf32>
    %6 = vector.extract_strided_slice %3 {offsets = [0, 64], sizes = [16, 64], strides = [1, 1]} : vector<16x192xf32> to vector<16x64xf32>
    %7 = vector.shape_cast %6 : vector<16x64xf32> to vector<1x16x64xf32>
    %8 = vector.extract_strided_slice %3 {offsets = [0, 128], sizes = [16, 64], strides = [1, 1]} : vector<16x192xf32> to vector<16x64xf32>
    %9 = vector.shape_cast %8 : vector<16x64xf32> to vector<1x16x64xf32>
    %10 = vector.extract_strided_slice %5 {offsets = [0, 0, 0], sizes = [1, 16, 8], strides = [1, 1, 1]} : vector<1x16x64xf32> to vector<1x16x8xf32>
    %11 = vector.extract_strided_slice %7 {offsets = [0, 0, 0], sizes = [1, 16, 8], strides = [1, 1, 1]} : vector<1x16x64xf32> to vector<1x16x8xf32>
    "tpu.trace_start"() <{level = 10 : i32, message = "bnd,bmd->bnm"}> : () -> ()
    %cst_4 = arith.constant dense<0.000000e+00> : vector<1x16x16xf32>
    %12 = tpu.matmul %10, %11, %cst_4 {dimension_numbers = #tpu.dot_dimension_numbers<[2], [2], [1], [1], [0, 0, 0, 1, 1, 1], [0], [0]>} : vector<1x16x8xf32>, vector<1x16x8xf32>, vector<1x16x16xf32> -> vector<1x16x16xf32>
    "tpu.trace_stop"() : () -> ()
    %cst_5 = arith.constant dense<0xFF800000> : vector<1x16xf32>
    %13 = vector.multi_reduction <maximumf>, %12, %cst_5 [2] : vector<1x16x16xf32> to vector<1x16xf32>
    %14 = vector.shape_cast %13 : vector<1x16xf32> to vector<1x16x1xf32>
    %15 = vector.broadcast %14 : vector<1x16x1xf32> to vector<1x16x16xf32>
    %16 = arith.subf %12, %15 : vector<1x16x16xf32>
    %17 = math.exp %16 : vector<1x16x16xf32>
    %cst_6 = arith.constant dense<0.000000e+00> : vector<1x16xf32>
    %18 = vector.multi_reduction <add>, %17, %cst_6 [2] : vector<1x16x16xf32> to vector<1x16xf32>
    %19 = vector.shape_cast %18 : vector<1x16xf32> to vector<1x16x1xf32>
    %20 = tpu.reciprocal %19 {approx = true} : vector<1x16x1xf32> -> vector<1x16x1xf32>
    %21 = vector.broadcast %20 : vector<1x16x1xf32> to vector<1x16x16xf32>
    %22 = arith.mulf %17, %21 : vector<1x16x16xf32>
    %23 = vector.extract_strided_slice %9 {offsets = [0, 0, 0], sizes = [1, 16, 8], strides = [1, 1, 1]} : vector<1x16x64xf32> to vector<1x16x8xf32>
    "tpu.trace_start"() <{level = 10 : i32, message = "bnm,bmd->bnd"}> : () -> ()
    %cst_7 = arith.constant dense<0.000000e+00> : vector<1x16x8xf32>
    %24 = tpu.matmul %22, %23, %cst_7 {dimension_numbers = #tpu.dot_dimension_numbers<[2], [1], [1], [2], [0, 0, 0, 1, 1, 2], [0], [0]>} : vector<1x16x16xf32>, vector<1x16x8xf32>, vector<1x16x8xf32> -> vector<1x16x8xf32>
    "tpu.trace_stop"() : () -> ()
    %25 = vector.extract_strided_slice %5 {offsets = [0, 0, 8], sizes = [1, 16, 8], strides = [1, 1, 1]} : vector<1x16x64xf32> to vector<1x16x8xf32>
    %26 = vector.extract_strided_slice %7 {offsets = [0, 0, 8], sizes = [1, 16, 8], strides = [1, 1, 1]} : vector<1x16x64xf32> to vector<1x16x8xf32>
    "tpu.trace_start"() <{level = 10 : i32, message = "bnd,bmd->bnm"}> : () -> ()
    %cst_8 = arith.constant dense<0.000000e+00> : vector<1x16x16xf32>
    %27 = tpu.matmul %25, %26, %cst_8 {dimension_numbers = #tpu.dot_dimension_numbers<[2], [2], [1], [1], [0, 0, 0, 1, 1, 1], [0], [0]>} : vector<1x16x8xf32>, vector<1x16x8xf32>, vector<1x16x16xf32> -> vector<1x16x16xf32>
    "tpu.trace_stop"() : () -> ()
    %cst_9 = arith.constant dense<0xFF800000> : vector<1x16xf32>
    %28 = vector.multi_reduction <maximumf>, %27, %cst_9 [2] : vector<1x16x16xf32> to vector<1x16xf32>
    %29 = vector.shape_cast %28 : vector<1x16xf32> to vector<1x16x1xf32>
    %30 = vector.broadcast %29 : vector<1x16x1xf32> to vector<1x16x16xf32>
    %31 = arith.subf %27, %30 : vector<1x16x16xf32>
    %32 = math.exp %31 : vector<1x16x16xf32>
    %cst_10 = arith.constant dense<0.000000e+00> : vector<1x16xf32>
    %33 = vector.multi_reduction <add>, %32, %cst_10 [2] : vector<1x16x16xf32> to vector<1x16xf32>
    %34 = vector.shape_cast %33 : vector<1x16xf32> to vector<1x16x1xf32>
    %35 = tpu.reciprocal %34 {approx = true} : vector<1x16x1xf32> -> vector<1x16x1xf32>
    %36 = vector.broadcast %35 : vector<1x16x1xf32> to vector<1x16x16xf32>
    %37 = arith.mulf %32, %36 : vector<1x16x16xf32>
    %38 = vector.extract_strided_slice %9 {offsets = [0, 0, 8], sizes = [1, 16, 8], strides = [1, 1, 1]} : vector<1x16x64xf32> to vector<1x16x8xf32>
    "tpu.trace_start"() <{level = 10 : i32, message = "bnm,bmd->bnd"}> : () -> ()
    %cst_11 = arith.constant dense<0.000000e+00> : vector<1x16x8xf32>
    %39 = tpu.matmul %37, %38, %cst_11 {dimension_numbers = #tpu.dot_dimension_numbers<[2], [1], [1], [2], [0, 0, 0, 1, 1, 2], [0], [0]>} : vector<1x16x16xf32>, vector<1x16x8xf32>, vector<1x16x8xf32> -> vector<1x16x8xf32>
    "tpu.trace_stop"() : () -> ()
    %40 = vector.extract_strided_slice %5 {offsets = [0, 0, 16], sizes = [1, 16, 8], strides = [1, 1, 1]} : vector<1x16x64xf32> to vector<1x16x8xf32>
    %41 = vector.extract_strided_slice %7 {offsets = [0, 0, 16], sizes = [1, 16, 8], strides = [1, 1, 1]} : vector<1x16x64xf32> to vector<1x16x8xf32>
    "tpu.trace_start"() <{level = 10 : i32, message = "bnd,bmd->bnm"}> : () -> ()
    %cst_12 = arith.constant dense<0.000000e+00> : vector<1x16x16xf32>
    %42 = tpu.matmul %40, %41, %cst_12 {dimension_numbers = #tpu.dot_dimension_numbers<[2], [2], [1], [1], [0, 0, 0, 1, 1, 1], [0], [0]>} : vector<1x16x8xf32>, vector<1x16x8xf32>, vector<1x16x16xf32> -> vector<1x16x16xf32>
    "tpu.trace_stop"() : () -> ()
    %cst_13 = arith.constant dense<0xFF800000> : vector<1x16xf32>
    %43 = vector.multi_reduction <maximumf>, %42, %cst_13 [2] : vector<1x16x16xf32> to vector<1x16xf32>
    %44 = vector.shape_cast %43 : vector<1x16xf32> to vector<1x16x1xf32>
    %45 = vector.broadcast %44 : vector<1x16x1xf32> to vector<1x16x16xf32>
    %46 = arith.subf %42, %45 : vector<1x16x16xf32>
    %47 = math.exp %46 : vector<1x16x16xf32>
    %cst_14 = arith.constant dense<0.000000e+00> : vector<1x16xf32>
    %48 = vector.multi_reduction <add>, %47, %cst_14 [2] : vector<1x16x16xf32> to vector<1x16xf32>
    %49 = vector.shape_cast %48 : vector<1x16xf32> to vector<1x16x1xf32>
    %50 = tpu.reciprocal %49 {approx = true} : vector<1x16x1xf32> -> vector<1x16x1xf32>
    %51 = vector.broadcast %50 : vector<1x16x1xf32> to vector<1x16x16xf32>
    %52 = arith.mulf %47, %51 : vector<1x16x16xf32>
    %53 = vector.extract_strided_slice %9 {offsets = [0, 0, 16], sizes = [1, 16, 8], strides = [1, 1, 1]} : vector<1x16x64xf32> to vector<1x16x8xf32>
    "tpu.trace_start"() <{level = 10 : i32, message = "bnm,bmd->bnd"}> : () -> ()
    %cst_15 = arith.constant dense<0.000000e+00> : vector<1x16x8xf32>
    %54 = tpu.matmul %52, %53, %cst_15 {dimension_numbers = #tpu.dot_dimension_numbers<[2], [1], [1], [2], [0, 0, 0, 1, 1, 2], [0], [0]>} : vector<1x16x16xf32>, vector<1x16x8xf32>, vector<1x16x8xf32> -> vector<1x16x8xf32>
    "tpu.trace_stop"() : () -> ()
    %55 = vector.extract_strided_slice %5 {offsets = [0, 0, 24], sizes = [1, 16, 8], strides = [1, 1, 1]} : vector<1x16x64xf32> to vector<1x16x8xf32>
    %56 = vector.extract_strided_slice %7 {offsets = [0, 0, 24], sizes = [1, 16, 8], strides = [1, 1, 1]} : vector<1x16x64xf32> to vector<1x16x8xf32>
    "tpu.trace_start"() <{level = 10 : i32, message = "bnd,bmd->bnm"}> : () -> ()
    %cst_16 = arith.constant dense<0.000000e+00> : vector<1x16x16xf32>
    %57 = tpu.matmul %55, %56, %cst_16 {dimension_numbers = #tpu.dot_dimension_numbers<[2], [2], [1], [1], [0, 0, 0, 1, 1, 1], [0], [0]>} : vector<1x16x8xf32>, vector<1x16x8xf32>, vector<1x16x16xf32> -> vector<1x16x16xf32>
    "tpu.trace_stop"() : () -> ()
    %cst_17 = arith.constant dense<0xFF800000> : vector<1x16xf32>
    %58 = vector.multi_reduction <maximumf>, %57, %cst_17 [2] : vector<1x16x16xf32> to vector<1x16xf32>
    %59 = vector.shape_cast %58 : vector<1x16xf32> to vector<1x16x1xf32>
    %60 = vector.broadcast %59 : vector<1x16x1xf32> to vector<1x16x16xf32>
    %61 = arith.subf %57, %60 : vector<1x16x16xf32>
    %62 = math.exp %61 : vector<1x16x16xf32>
    %cst_18 = arith.constant dense<0.000000e+00> : vector<1x16xf32>
    %63 = vector.multi_reduction <add>, %62, %cst_18 [2] : vector<1x16x16xf32> to vector<1x16xf32>
    %64 = vector.shape_cast %63 : vector<1x16xf32> to vector<1x16x1xf32>
    %65 = tpu.reciprocal %64 {approx = true} : vector<1x16x1xf32> -> vector<1x16x1xf32>
    %66 = vector.broadcast %65 : vector<1x16x1xf32> to vector<1x16x16xf32>
    %67 = arith.mulf %62, %66 : vector<1x16x16xf32>
    %68 = vector.extract_strided_slice %9 {offsets = [0, 0, 24], sizes = [1, 16, 8], strides = [1, 1, 1]} : vector<1x16x64xf32> to vector<1x16x8xf32>
    "tpu.trace_start"() <{level = 10 : i32, message = "bnm,bmd->bnd"}> : () -> ()
    %cst_19 = arith.constant dense<0.000000e+00> : vector<1x16x8xf32>
    %69 = tpu.matmul %67, %68, %cst_19 {dimension_numbers = #tpu.dot_dimension_numbers<[2], [1], [1], [2], [0, 0, 0, 1, 1, 2], [0], [0]>} : vector<1x16x16xf32>, vector<1x16x8xf32>, vector<1x16x8xf32> -> vector<1x16x8xf32>
    "tpu.trace_stop"() : () -> ()
    %70 = vector.extract_strided_slice %5 {offsets = [0, 0, 32], sizes = [1, 16, 8], strides = [1, 1, 1]} : vector<1x16x64xf32> to vector<1x16x8xf32>
    %71 = vector.extract_strided_slice %7 {offsets = [0, 0, 32], sizes = [1, 16, 8], strides = [1, 1, 1]} : vector<1x16x64xf32> to vector<1x16x8xf32>
    "tpu.trace_start"() <{level = 10 : i32, message = "bnd,bmd->bnm"}> : () -> ()
    %cst_20 = arith.constant dense<0.000000e+00> : vector<1x16x16xf32>
    %72 = tpu.matmul %70, %71, %cst_20 {dimension_numbers = #tpu.dot_dimension_numbers<[2], [2], [1], [1], [0, 0, 0, 1, 1, 1], [0], [0]>} : vector<1x16x8xf32>, vector<1x16x8xf32>, vector<1x16x16xf32> -> vector<1x16x16xf32>
    "tpu.trace_stop"() : () -> ()
    %cst_21 = arith.constant dense<0xFF800000> : vector<1x16xf32>
    %73 = vector.multi_reduction <maximumf>, %72, %cst_21 [2] : vector<1x16x16xf32> to vector<1x16xf32>
    %74 = vector.shape_cast %73 : vector<1x16xf32> to vector<1x16x1xf32>
    %75 = vector.broadcast %74 : vector<1x16x1xf32> to vector<1x16x16xf32>
    %76 = arith.subf %72, %75 : vector<1x16x16xf32>
    %77 = math.exp %76 : vector<1x16x16xf32>
    %cst_22 = arith.constant dense<0.000000e+00> : vector<1x16xf32>
    %78 = vector.multi_reduction <add>, %77, %cst_22 [2] : vector<1x16x16xf32> to vector<1x16xf32>
    %79 = vector.shape_cast %78 : vector<1x16xf32> to vector<1x16x1xf32>
    %80 = tpu.reciprocal %79 {approx = true} : vector<1x16x1xf32> -> vector<1x16x1xf32>
    %81 = vector.broadcast %80 : vector<1x16x1xf32> to vector<1x16x16xf32>
    %82 = arith.mulf %77, %81 : vector<1x16x16xf32>
    %83 = vector.extract_strided_slice %9 {offsets = [0, 0, 32], sizes = [1, 16, 8], strides = [1, 1, 1]} : vector<1x16x64xf32> to vector<1x16x8xf32>
    "tpu.trace_start"() <{level = 10 : i32, message = "bnm,bmd->bnd"}> : () -> ()
    %cst_23 = arith.constant dense<0.000000e+00> : vector<1x16x8xf32>
    %84 = tpu.matmul %82, %83, %cst_23 {dimension_numbers = #tpu.dot_dimension_numbers<[2], [1], [1], [2], [0, 0, 0, 1, 1, 2], [0], [0]>} : vector<1x16x16xf32>, vector<1x16x8xf32>, vector<1x16x8xf32> -> vector<1x16x8xf32>
    "tpu.trace_stop"() : () -> ()
    %85 = vector.extract_strided_slice %5 {offsets = [0, 0, 40], sizes = [1, 16, 8], strides = [1, 1, 1]} : vector<1x16x64xf32> to vector<1x16x8xf32>
    %86 = vector.extract_strided_slice %7 {offsets = [0, 0, 40], sizes = [1, 16, 8], strides = [1, 1, 1]} : vector<1x16x64xf32> to vector<1x16x8xf32>
    "tpu.trace_start"() <{level = 10 : i32, message = "bnd,bmd->bnm"}> : () -> ()
    %cst_24 = arith.constant dense<0.000000e+00> : vector<1x16x16xf32>
    %87 = tpu.matmul %85, %86, %cst_24 {dimension_numbers = #tpu.dot_dimension_numbers<[2], [2], [1], [1], [0, 0, 0, 1, 1, 1], [0], [0]>} : vector<1x16x8xf32>, vector<1x16x8xf32>, vector<1x16x16xf32> -> vector<1x16x16xf32>
    "tpu.trace_stop"() : () -> ()
    %cst_25 = arith.constant dense<0xFF800000> : vector<1x16xf32>
    %88 = vector.multi_reduction <maximumf>, %87, %cst_25 [2] : vector<1x16x16xf32> to vector<1x16xf32>
    %89 = vector.shape_cast %88 : vector<1x16xf32> to vector<1x16x1xf32>
    %90 = vector.broadcast %89 : vector<1x16x1xf32> to vector<1x16x16xf32>
    %91 = arith.subf %87, %90 : vector<1x16x16xf32>
    %92 = math.exp %91 : vector<1x16x16xf32>
    %cst_26 = arith.constant dense<0.000000e+00> : vector<1x16xf32>
    %93 = vector.multi_reduction <add>, %92, %cst_26 [2] : vector<1x16x16xf32> to vector<1x16xf32>
    %94 = vector.shape_cast %93 : vector<1x16xf32> to vector<1x16x1xf32>
    %95 = tpu.reciprocal %94 {approx = true} : vector<1x16x1xf32> -> vector<1x16x1xf32>
    %96 = vector.broadcast %95 : vector<1x16x1xf32> to vector<1x16x16xf32>
    %97 = arith.mulf %92, %96 : vector<1x16x16xf32>
    %98 = vector.extract_strided_slice %9 {offsets = [0, 0, 40], sizes = [1, 16, 8], strides = [1, 1, 1]} : vector<1x16x64xf32> to vector<1x16x8xf32>
    "tpu.trace_start"() <{level = 10 : i32, message = "bnm,bmd->bnd"}> : () -> ()
    %cst_27 = arith.constant dense<0.000000e+00> : vector<1x16x8xf32>
    %99 = tpu.matmul %97, %98, %cst_27 {dimension_numbers = #tpu.dot_dimension_numbers<[2], [1], [1], [2], [0, 0, 0, 1, 1, 2], [0], [0]>} : vector<1x16x16xf32>, vector<1x16x8xf32>, vector<1x16x8xf32> -> vector<1x16x8xf32>
    "tpu.trace_stop"() : () -> ()
    %100 = vector.extract_strided_slice %5 {offsets = [0, 0, 48], sizes = [1, 16, 8], strides = [1, 1, 1]} : vector<1x16x64xf32> to vector<1x16x8xf32>
    %101 = vector.extract_strided_slice %7 {offsets = [0, 0, 48], sizes = [1, 16, 8], strides = [1, 1, 1]} : vector<1x16x64xf32> to vector<1x16x8xf32>
    "tpu.trace_start"() <{level = 10 : i32, message = "bnd,bmd->bnm"}> : () -> ()
    %cst_28 = arith.constant dense<0.000000e+00> : vector<1x16x16xf32>
    %102 = tpu.matmul %100, %101, %cst_28 {dimension_numbers = #tpu.dot_dimension_numbers<[2], [2], [1], [1], [0, 0, 0, 1, 1, 1], [0], [0]>} : vector<1x16x8xf32>, vector<1x16x8xf32>, vector<1x16x16xf32> -> vector<1x16x16xf32>
    "tpu.trace_stop"() : () -> ()
    %cst_29 = arith.constant dense<0xFF800000> : vector<1x16xf32>
    %103 = vector.multi_reduction <maximumf>, %102, %cst_29 [2] : vector<1x16x16xf32> to vector<1x16xf32>
    %104 = vector.shape_cast %103 : vector<1x16xf32> to vector<1x16x1xf32>
    %105 = vector.broadcast %104 : vector<1x16x1xf32> to vector<1x16x16xf32>
    %106 = arith.subf %102, %105 : vector<1x16x16xf32>
    %107 = math.exp %106 : vector<1x16x16xf32>
    %cst_30 = arith.constant dense<0.000000e+00> : vector<1x16xf32>
    %108 = vector.multi_reduction <add>, %107, %cst_30 [2] : vector<1x16x16xf32> to vector<1x16xf32>
    %109 = vector.shape_cast %108 : vector<1x16xf32> to vector<1x16x1xf32>
    %110 = tpu.reciprocal %109 {approx = true} : vector<1x16x1xf32> -> vector<1x16x1xf32>
    %111 = vector.broadcast %110 : vector<1x16x1xf32> to vector<1x16x16xf32>
    %112 = arith.mulf %107, %111 : vector<1x16x16xf32>
    %113 = vector.extract_strided_slice %9 {offsets = [0, 0, 48], sizes = [1, 16, 8], strides = [1, 1, 1]} : vector<1x16x64xf32> to vector<1x16x8xf32>
    "tpu.trace_start"() <{level = 10 : i32, message = "bnm,bmd->bnd"}> : () -> ()
    %cst_31 = arith.constant dense<0.000000e+00> : vector<1x16x8xf32>
    %114 = tpu.matmul %112, %113, %cst_31 {dimension_numbers = #tpu.dot_dimension_numbers<[2], [1], [1], [2], [0, 0, 0, 1, 1, 2], [0], [0]>} : vector<1x16x16xf32>, vector<1x16x8xf32>, vector<1x16x8xf32> -> vector<1x16x8xf32>
    "tpu.trace_stop"() : () -> ()
    %115 = vector.extract_strided_slice %5 {offsets = [0, 0, 56], sizes = [1, 16, 8], strides = [1, 1, 1]} : vector<1x16x64xf32> to vector<1x16x8xf32>
    %116 = vector.extract_strided_slice %7 {offsets = [0, 0, 56], sizes = [1, 16, 8], strides = [1, 1, 1]} : vector<1x16x64xf32> to vector<1x16x8xf32>
    "tpu.trace_start"() <{level = 10 : i32, message = "bnd,bmd->bnm"}> : () -> ()
    %cst_32 = arith.constant dense<0.000000e+00> : vector<1x16x16xf32>
    %117 = tpu.matmul %115, %116, %cst_32 {dimension_numbers = #tpu.dot_dimension_numbers<[2], [2], [1], [1], [0, 0, 0, 1, 1, 1], [0], [0]>} : vector<1x16x8xf32>, vector<1x16x8xf32>, vector<1x16x16xf32> -> vector<1x16x16xf32>
    "tpu.trace_stop"() : () -> ()
    %cst_33 = arith.constant dense<0xFF800000> : vector<1x16xf32>
    %118 = vector.multi_reduction <maximumf>, %117, %cst_33 [2] : vector<1x16x16xf32> to vector<1x16xf32>
    %119 = vector.shape_cast %118 : vector<1x16xf32> to vector<1x16x1xf32>
    %120 = vector.broadcast %119 : vector<1x16x1xf32> to vector<1x16x16xf32>
    %121 = arith.subf %117, %120 : vector<1x16x16xf32>
    %122 = math.exp %121 : vector<1x16x16xf32>
    %cst_34 = arith.constant dense<0.000000e+00> : vector<1x16xf32>
    %123 = vector.multi_reduction <add>, %122, %cst_34 [2] : vector<1x16x16xf32> to vector<1x16xf32>
    %124 = vector.shape_cast %123 : vector<1x16xf32> to vector<1x16x1xf32>
    %125 = tpu.reciprocal %124 {approx = true} : vector<1x16x1xf32> -> vector<1x16x1xf32>
    %126 = vector.broadcast %125 : vector<1x16x1xf32> to vector<1x16x16xf32>
    %127 = arith.mulf %122, %126 : vector<1x16x16xf32>
    %128 = vector.extract_strided_slice %9 {offsets = [0, 0, 56], sizes = [1, 16, 8], strides = [1, 1, 1]} : vector<1x16x64xf32> to vector<1x16x8xf32>
    "tpu.trace_start"() <{level = 10 : i32, message = "bnm,bmd->bnd"}> : () -> ()
    %cst_35 = arith.constant dense<0.000000e+00> : vector<1x16x8xf32>
    %129 = tpu.matmul %127, %128, %cst_35 {dimension_numbers = #tpu.dot_dimension_numbers<[2], [1], [1], [2], [0, 0, 0, 1, 1, 2], [0], [0]>} : vector<1x16x16xf32>, vector<1x16x8xf32>, vector<1x16x8xf32> -> vector<1x16x8xf32>
    "tpu.trace_stop"() : () -> ()
    %130 = tpu.concatenate %24, %39, %54, %69, %84, %99, %114, %129 in 2 : vector<1x16x8xf32>, vector<1x16x8xf32>, vector<1x16x8xf32>, vector<1x16x8xf32>, vector<1x16x8xf32>, vector<1x16x8xf32>, vector<1x16x8xf32>, vector<1x16x8xf32> -> vector<1x16x64xf32>
    %131 = vector.shape_cast %130 : vector<1x16x64xf32> to vector<16x64xf32>
    %c0_36 = arith.constant 0 : index
    %c0_37 = arith.constant 0 : index
    %132 = vector.load %arg3[%c0_36, %c0_37] : memref<64x128xf32, #tpu.memory_space<vmem>>, vector<64x128xf32>
    %cst_38 = arith.constant dense<0.000000e+00> : vector<16x128xf32>
    %133 = tpu.matmul %131, %132, %cst_38 {dimension_numbers = #tpu.dot_dimension_numbers<[1], [0], [0], [1], [0, 0, 1, 1], [], []>} : vector<16x64xf32>, vector<64x128xf32>, vector<16x128xf32> -> vector<16x128xf32>
    %c0_39 = arith.constant 0 : index
    %c0_40 = arith.constant 0 : index
    %134 = vector.load %arg4[%c0_39, %c0_40] : memref<1x128xf32, #tpu.memory_space<vmem>>, vector<1x128xf32>
    %135 = vector.broadcast %134 : vector<1x128xf32> to vector<16x128xf32>
    %136 = arith.addf %133, %135 : vector<16x128xf32>
    %137 = vector.shape_cast %136 : vector<16x128xf32> to vector<1x16x128xf32>
    %c0_41 = arith.constant 0 : index
    %c0_42 = arith.constant 0 : index
    %c0_43 = arith.constant 0 : index
    %138 = vector.load %arg5[%c0_41, %c0_42, %c0_43] : memref<1x16x128xf32, #tpu.memory_space<vmem>>, vector<1x16x128xf32>
    tpu.vector_store %arg5[%c0_41, %c0_42, %c0_43], %137 {strides = array<i32>} : memref<1x16x128xf32, #tpu.memory_space<vmem>>, vector<1x16x128xf32>,
    return
  }
  func.func @transform_0(%arg0: i32) -> (i32, i32, i32) {
    %c0_i32 = arith.constant 0 : i32
    %c0_i32_0 = arith.constant 0 : i32
    %c0_i32_1 = arith.constant 0 : i32
    return %arg0, %c0_i32, %c0_i32_0 : i32, i32, i32
  }
  func.func @transform_1(%arg0: i32) -> (i32, i32) {
    %c0_i32 = arith.constant 0 : i32
    %c0_i32_0 = arith.constant 0 : i32
    %c0_i32_1 = arith.constant 0 : i32
    return %c0_i32, %c0_i32_0 : i32, i32
  }
  func.func @transform_2(%arg0: i32) -> (i32, i32) {
    %c0_i32 = arith.constant 0 : i32
    %c0_i32_0 = arith.constant 0 : i32
    %c0_i32_1 = arith.constant 0 : i32
    return %c0_i32, %c0_i32_0 : i32, i32
  }
  func.func @transform_3(%arg0: i32) -> (i32, i32) {
    %c0_i32 = arith.constant 0 : i32
    %c0_i32_0 = arith.constant 0 : i32
    %c0_i32_1 = arith.constant 0 : i32
    return %c0_i32, %c0_i32_0 : i32, i32
  }
  func.func @transform_4(%arg0: i32) -> (i32, i32, i32) {
    %c0_i32 = arith.constant 0 : i32
    %c0_i32_0 = arith.constant 0 : i32
    %c0_i32_1 = arith.constant 0 : i32
    return %arg0, %c0_i32, %c0_i32_0 : i32, i32, i32
  }
}

</mosaic_0001>

<llo_original>
// kernel: tpu_custom_call.1
$region0: #{tpu_custom_call.1}
  #allocation0 [shape = 'u32[]', space=smem, size = 0x4, offset = 0x4, fixed_abs, tag = 'smem constant byte address 0x4 - core index']
  #allocation1 [shape = 'u32[144,128]{1,0:T(1,128)}', space=vmem, size = 0x12000, scoped, tag = 'internal scratch']
  %s0 = inlined_call_operand.vmem [shape: f32[2,16,128], index: 0, kind: input, shape index: {}]
  %s1 = inlined_call_operand.vmem [shape: f32[128,192], index: 1, kind: input, shape index: {}]
  %s2 = inlined_call_operand.vmem [shape: f32[64,128], index: 2, kind: input, shape index: {}]
  %s3 = inlined_call_operand.vmem [shape: f32[1,128], index: 3, kind: input, shape index: {}]
  %s4 = inlined_call_operand.hbm [shape: f32[2,16,128], index: 4, kind: output, shape index: {}]
  %s5 = sld [smem:[#allocation0]]
  $region49: #{tpu_custom_call.1} parent=0
    _
  %s7 = ssub.s32 1, %s5
  %s8 = scalar_select 0, %s7, %s5
  $region1: #{tpu_custom_call.1} parent=0
    #allocation2 [shape = 'u8[16384]{0}', space=vmem, size = 0x4000, scoped, tag = 'output window, operand 0']
    #allocation3 [shape = 's32[2]{0}', space=sflag, size = 0x8, scoped, tag = 'scoped memory for tpu_custom_call.1']
    %9 = vsyncpa [#allocation3], 0
    %s10 = scalar_lea.sflag [#allocation3], 1
    %11 = vsyncpa %s10, 0
    loop: start=0, step=1, limit=4
    $region2: #{tpu_custom_call.1} parent=1 // loop_pre_header
      _
    $region3: #{tpu_custom_call.1} parent=1 // loop_header
      %s13 = sphi 0, %s17
      %p14 = scmp.ge.s32.totalorder %s13, 4
      %s23 = sphi 0, %s25
      %s26 = sphi 0, %s23
      %s27 = sphi 0, %s26
      %s43 = sphi 0, %s27
      %s47 = sphi 0, %s47
      %s49 = sphi 0, %s47
      %s50 = sphi 0, %s49
      %s64 = sphi 0, %s50
      %s68 = sphi 0, %s68
      %s70 = sphi 0, %s68
      %s71 = sphi 0, %s70
      %s85 = sphi 0, %s71
      %s89 = sphi 0, %s89
      %s91 = sphi 0, %s89
      %s92 = sphi 0, %s91
      %s106 = sphi 0, %s92
      %s112 = sphi 0, %s114
      %s115 = sphi 0, %s112
      %s116 = sphi 0, %s115
      %s132 = sphi 0, %s116
    $region4: #{tpu_custom_call.1} parent=1 // loop_header_branch
      %16 = sbr.rel (%p14) target = $region8
    $region5: #{tpu_custom_call.1} parent=1 // loop_body
      %s18 = ssub.s32 %s13, 1
      %s19 = ssub.s32 %s13, 2
      %s20 = sadd.s32 %s13, 1
      %s21 = ssub.s32 %s13, %s20
      %p22 = scmp.eq.s32.totalorder %s21, 0
      %s24 = sadd.s32 %s23, 1
      %s25 = scalar_select %p22, %s23, %s24
      %p28 = pneg %p22
      %p29 = scmp.eq.s32.totalorder %s13, 1
      %p30 = por %p28, %p29
      %p31 = scmp.ne.s32.totalorder %s23, %s26
      %p32 = scmp.eq.s32.totalorder %s13, 0
      %p33 = por %p31, %p32
      %p34 = scmp.ne.s32.totalorder %s23, %s26
      %p35 = scmp.eq.s32.totalorder %s18, 1
      %p36 = por %p34, %p35
      %p37 = scmp.ne.s32.totalorder %s26, %s27
      %p38 = scmp.eq.s32.totalorder %s18, 0
      %p39 = por %p37, %p38
      %p40 = scmp.ne.s32.totalorder %s26, %s27
      %p41 = scmp.eq.s32.totalorder %s19, 1
      %p42 = por %p40, %p41
      %p44 = scmp.ne.s32.totalorder %s27, %s43
      %p45 = scmp.eq.s32.totalorder %s19, 0
      %p46 = por %p44, %p45
      %s48 = sadd.s32 %s47, 1
      %p51 = scmp.eq.s32.totalorder %s13, 1
      %p52 = scmp.ne.s32.totalorder %s47, %s49
      %p53 = scmp.eq.s32.totalorder %s13, 0
      %p54 = por %p52, %p53
      %p55 = scmp.ne.s32.totalorder %s47, %s49
      %p56 = scmp.eq.s32.totalorder %s18, 1
      %p57 = por %p55, %p56
      %p58 = scmp.ne.s32.totalorder %s49, %s50
      %p59 = scmp.eq.s32.totalorder %s18, 0
      %p60 = por %p58, %p59
      %p61 = scmp.ne.s32.totalorder %s49, %s50
      %p62 = scmp.eq.s32.totalorder %s19, 1
      %p63 = por %p61, %p62
      %p65 = scmp.ne.s32.totalorder %s50, %s64
      %p66 = scmp.eq.s32.totalorder %s19, 0
      %p67 = por %p65, %p66
      %s69 = sadd.s32 %s68, 1
      %p72 = scmp.eq.s32.totalorder %s13, 1
      %p73 = scmp.ne.s32.totalorder %s68, %s70
      %p74 = scmp.eq.s32.totalorder %s13, 0
      %p75 = por %p73, %p74
      %p76 = scmp.ne.s32.totalorder %s68, %s70
      %p77 = scmp.eq.s32.totalorder %s18, 1
      %p78 = por %p76, %p77
      %p79 = scmp.ne.s32.totalorder %s70, %s71
      %p80 = scmp.eq.s32.totalorder %s18, 0
      %p81 = por %p79, %p80
      %p82 = scmp.ne.s32.totalorder %s70, %s71
      %p83 = scmp.eq.s32.totalorder %s19, 1
      %p84 = por %p82, %p83
      %p86 = scmp.ne.s32.totalorder %s71, %s85
      %p87 = scmp.eq.s32.totalorder %s19, 0
      %p88 = por %p86, %p87
      %s90 = sadd.s32 %s89, 1
      %p93 = scmp.eq.s32.totalorder %s13, 1
      %p94 = scmp.ne.s32.totalorder %s89, %s91
      %p95 = scmp.eq.s32.totalorder %s13, 0
      %p96 = por %p94, %p95
      %p97 = scmp.ne.s32.totalorder %s89, %s91
      %p98 = scmp.eq.s32.totalorder %s18, 1
      %p99 = por %p97, %p98
      %p100 = scmp.ne.s32.totalorder %s91, %s92
      %p101 = scmp.eq.s32.totalorder %s18, 0
      %p102 = por %p100, %p101
      %p103 = scmp.ne.s32.totalorder %s91, %s92
      %p104 = scmp.eq.s32.totalorder %s19, 1
      %p105 = por %p103, %p104
      %p107 = scmp.ne.s32.totalorder %s92, %s106
      %p108 = scmp.eq.s32.totalorder %s19, 0
      %p109 = por %p107, %p108
      %s110 = ssub.s32 %s13, %s20
      %p111 = scmp.eq.s32.totalorder %s110, 0
      %s113 = sadd.s32 %s112, 1
      %s114 = scalar_select %p111, %s112, %s113
      %p117 = pneg %p111
      %p118 = scmp.eq.s32.totalorder %s13, 1
      %p119 = por %p117, %p118
      %p120 = scmp.ne.s32.totalorder %s112, %s115
      %p121 = scmp.eq.s32.totalorder %s13, 0
      %p122 = por %p120, %p121
      %p123 = scmp.ne.s32.totalorder %s112, %s115
      %p124 = scmp.eq.s32.totalorder %s18, 1
      %p125 = por %p123, %p124
      %p126 = scmp.ne.s32.totalorder %s115, %s116
      %p127 = scmp.eq.s32.totalorder %s18, 0
      %p128 = por %p126, %p127
      %p129 = scmp.ne.s32.totalorder %s115, %s116
      %p130 = scmp.eq.s32.totalorder %s19, 1
      %p131 = por %p129, %p130
      %p133 = scmp.ne.s32.totalorder %s116, %s132
      %p134 = scmp.eq.s32.totalorder %s19, 0
      %p135 = por %p133, %p134
      %p136 = scmp.le.s32.totalorder 1, %s13
      %p137 = scmp.lt.s32.totalorder %s13, 3
      %p138 = pnand %p136, %p137
      %p139 = pneg %p138
      // Predicated region
      $region9: #{tpu_custom_call.1} parent=5 // pred_check
        _
      $region10: #{tpu_custom_call.1} parent=5 // pred_check_branch
        %141 = sbr.rel (%p138) target = $region12
      $region11: #{tpu_custom_call.1} parent=5 // pred_region
        %s142 = ssub.s32 %s13, 1
        // Predicated region
        $region13: #{tpu_custom_call.1} parent=11 // pred_check
          %p143 = pneg %p60
        $region14: #{tpu_custom_call.1} parent=11 // pred_check_branch
          %145 = sbr.rel (%p143) target = $region16
        $region15: #{tpu_custom_call.1} parent=11 // pred_region
          _
        $region16: #{tpu_custom_call.1} parent=11 // pred_fallthru
          _
        // Predicated region
        $region17: #{tpu_custom_call.1} parent=11 // pred_check
          %p146 = pneg %p81
        $region18: #{tpu_custom_call.1} parent=11 // pred_check_branch
          %148 = sbr.rel (%p146) target = $region20
        $region19: #{tpu_custom_call.1} parent=11 // pred_region
          _
        $region20: #{tpu_custom_call.1} parent=11 // pred_fallthru
          _
        // Predicated region
        $region21: #{tpu_custom_call.1} parent=11 // pred_check
          %p149 = pneg %p102
        $region22: #{tpu_custom_call.1} parent=11 // pred_check_branch
          %151 = sbr.rel (%p149) target = $region24
        $region23: #{tpu_custom_call.1} parent=11 // pred_region
          _
        $region24: #{tpu_custom_call.1} parent=11 // pred_fallthru
          _
      $region12: #{tpu_custom_call.1} parent=5 // pred_fallthru
        _
      %p152 = scmp.lt.s32.totalorder %s13, 2
      // Predicated region
      $region25: #{tpu_custom_call.1} parent=5 // pred_check
        %p153 = pneg %p152
      $region26: #{tpu_custom_call.1} parent=5 // pred_check_branch
        %155 = sbr.rel (%p153) target = $region28
      $region27: #{tpu_custom_call.1} parent=5 // pred_region
        // Predicated region
        $region29: #{tpu_custom_call.1} parent=27 // pred_check
          %p156 = pneg %p33
        $region30: #{tpu_custom_call.1} parent=27 // pred_check_branch
          %158 = sbr.rel (%p156) target = $region32
        $region31: #{tpu_custom_call.1} parent=27 // pred_region
          %p159 = scmp.lt.s32.totalorder %s13, 1
          %s160 = scalar_select %p159, %s13, 1
          %s161 = smul.addr %s160, 2
          %s162 = smul.addr %s161, 8
          %s163 = scalar_lea.vmem %s0, %s162
        $region32: #{tpu_custom_call.1} parent=27 // pred_fallthru
          _
      $region28: #{tpu_custom_call.1} parent=5 // pred_fallthru
        _
      %p164 = scmp.le.s32.totalorder 1, %s13
      %p165 = scmp.lt.s32.totalorder %s13, 3
      %p166 = pnand %p164, %p165
      %p167 = pneg %p166
      // Predicated region
      $region33: #{tpu_custom_call.1} parent=5 // pred_check
        _
      $region34: #{tpu_custom_call.1} parent=5 // pred_check_branch
        %169 = sbr.rel (%p166) target = $region36
      $region35: #{tpu_custom_call.1} parent=5 // pred_region
        %s170 = ssub.s32 %s13, 1
        %p171 = scmp.lt.s32.totalorder %s18, 1
        %s172 = scalar_select %p171, %s18, 1
        %s173 = smul.addr %s172, 2
        %s174 = smul.addr %s173, 8
        %s175 = scalar_lea.vmem %s0, %s174
        %p176 = pneg %p39
        %p177 = pneg %p36
        %p178 = pneg %p60
        %p179 = pneg %p57
        %p180 = pneg %p81
        %p181 = pneg %p78
        %p182 = pneg %p102
        %p183 = pneg %p99
        %p184 = pneg %p128
        %p185 = pneg %p125
        %s186 = sand.u32 %s115, 1
        %s187 = scalar_lea.sflag [#allocation3], %s186
        %s188 = sand.u32 %s115, 1
        %s189 = smul.addr %s188, 16
        %s190 = scalar_lea.vmem [#allocation2], %s189
        %p191 = scmp.lt.s32.totalorder %s18, 1
        %s192 = scalar_select %p191, %s18, 1
        %s193 = smul.addr %s192, 2
        %s194 = smul.addr %s193, 8
        %s195 = scalar_lea.vmem %s0, %s194
        %v196 = vld [vmem:[%s195] sm:$0xff]
        %v197 = vld [vmem:[%s195 + $0x8] sm:$0xff]
        %v198 = vld [vmem:[%s1] sm:$0xff]
        %v199 = vld [vmem:[%s1 + $0x8] sm:$0xff]
        %v200 = vld [vmem:[%s1 + $0x10] sm:$0xff]
        %v201 = vld [vmem:[%s1 + $0x18] sm:$0xff]
        %v202 = vld [vmem:[%s1 + $0x20] sm:$0xff]
        %v203 = vld [vmem:[%s1 + $0x28] sm:$0xff]
        %v204 = vld [vmem:[%s1 + $0x30] sm:$0xff]
        %v205 = vld [vmem:[%s1 + $0x38] sm:$0xff]
        %v206 = vld [vmem:[%s1 + $0x40] sm:$0xff]
        %v207 = vld [vmem:[%s1 + $0x48] sm:$0xff]
        %v208 = vld [vmem:[%s1 + $0x50] sm:$0xff]
        %v209 = vld [vmem:[%s1 + $0x58] sm:$0xff]
        %v210 = vld [vmem:[%s1 + $0x60] sm:$0xff]
        %v211 = vld [vmem:[%s1 + $0x68] sm:$0xff]
        %v212 = vld [vmem:[%s1 + $0x70] sm:$0xff]
        %v213 = vld [vmem:[%s1 + $0x78] sm:$0xff]
        %v214 = vld [vmem:[%s1 + $0x80] sm:$0xff]
        %v215 = vld [vmem:[%s1 + $0x88] sm:$0xff]
        %v216 = vld [vmem:[%s1 + $0x90] sm:$0xff]
        %v217 = vld [vmem:[%s1 + $0x98] sm:$0xff]
        %v218 = vld [vmem:[%s1 + $0xa0] sm:$0xff]
        %v219 = vld [vmem:[%s1 + $0xa8] sm:$0xff]
        %v220 = vld [vmem:[%s1 + $0xb0] sm:$0xff]
        %v221 = vld [vmem:[%s1 + $0xb8] sm:$0xff]
        %v222 = vld [vmem:[%s1 + $0xc0] sm:$0xff]
        %v223 = vld [vmem:[%s1 + $0xc8] sm:$0xff]
        %v224 = vld [vmem:[%s1 + $0xd0] sm:$0xff]
        %v225 = vld [vmem:[%s1 + $0xd8] sm:$0xff]
        %v226 = vld [vmem:[%s1 + $0xe0] sm:$0xff]
        %v227 = vld [vmem:[%s1 + $0xe8] sm:$0xff]
        %v228 = vld [vmem:[%s1 + $0xf0] sm:$0xff]
        %v229 = vld [vmem:[%s1 + $0xf8] sm:$0xff]
        %230 = vmatprep.subr.mxu0 %v199
        %231 = vmatpush1.msra.mxu0 %v198
        %232 = vmatprep.subr.mxu0 %v201
        %233 = vmatpush1.msra.mxu0 %v200
        %234 = vmatprep.subr.mxu0 %v203
        %235 = vmatpush1.msra.mxu0 %v202
        %236 = vmatprep.subr.mxu0 %v205
        %237 = vmatpush1.msra.mxu0 %v204
        %238 = vmatprep.subr.mxu0 %v207
        %239 = vmatpush1.msra.mxu0 %v206
        %240 = vmatprep.subr.mxu0 %v209
        %241 = vmatpush1.msra.mxu0 %v208
        %242 = vmatprep.subr.mxu0 %v211
        %243 = vmatpush1.msra.mxu0 %v210
        %244 = vmatprep.subr.mxu0 %v213
        %245 = vmatpush1.msra.mxu0 %v212
        %246 = vmatprep.subr.mxu0 %v215
        %247 = vmatpush1.msra.mxu0 %v214
        %248 = vmatprep.subr.mxu0 %v217
        %249 = vmatpush1.msra.mxu0 %v216
        %250 = vmatprep.subr.mxu0 %v219
        %251 = vmatpush1.msra.mxu0 %v218
        %252 = vmatprep.subr.mxu0 %v221
        %253 = vmatpush1.msra.mxu0 %v220
        %254 = vmatprep.subr.mxu0 %v223
        %255 = vmatpush1.msra.mxu0 %v222
        %256 = vmatprep.subr.mxu0 %v225
        %257 = vmatpush1.msra.mxu0 %v224
        %258 = vmatprep.subr.mxu0 %v227
        %259 = vmatpush1.msra.mxu0 %v226
        %260 = vmatprep.subr.mxu0 %v229
        %261 = vmatpush1.msra.mxu0 %v228
        %262 = vmatprep.subr.mxu0 0.0
        %263 = vmatpush1.msra.mxu0 0.0
        %264 = vmatprep.subr.mxu0 0.0
        %265 = vmatpush1.msra.mxu0 0.0
        %266 = vmatprep.subr.mxu0 0.0
        %267 = vmatpush1.msra.mxu0 0.0
        %268 = vmatprep.subr.mxu0 0.0
        %269 = vmatpush1.msra.mxu0 0.0
        %270 = vmatprep.subr.mxu0 0.0
        %271 = vmatpush1.msra.mxu0 0.0
        %272 = vmatprep.subr.mxu0 0.0
        %273 = vmatpush1.msra.mxu0 0.0
        %274 = vmatprep.subr.mxu0 0.0
        %275 = vmatpush1.msra.mxu0 0.0
        %276 = vmatprep.subr.mxu0 0.0
        %277 = vmatpush1.msra.mxu0 0.0
        %278 = vmatprep.subr.mxu0 0.0
        %279 = vmatpush1.msra.mxu0 0.0
        %280 = vmatprep.subr.mxu0 0.0
        %281 = vmatpush1.msra.mxu0 0.0
        %282 = vmatprep.subr.mxu0 0.0
        %283 = vmatpush1.msra.mxu0 0.0
        %284 = vmatprep.subr.mxu0 0.0
        %285 = vmatpush1.msra.mxu0 0.0
        %286 = vmatprep.subr.mxu0 0.0
        %287 = vmatpush1.msra.mxu0 0.0
        %288 = vmatprep.subr.mxu0 0.0
        %289 = vmatpush1.msra.mxu0 0.0
        %290 = vmatprep.subr.mxu0 0.0
        %291 = vmatpush1.msra.mxu0 0.0
        %292 = vmatprep.subr.mxu0 0.0
        %293 = vmatpush1.msra.mxu0 0.0
        %294 = vmatprep.mubr.f32.mxu0 0.0
        %295 = vmatmul.mubr.f32.gmra.mrb[0].mxu0 %v196
        %v296 = vpop.f32.mrb[0].mxu0
        %v297 = vadd.f32 0.0, %v296
        %v298 = vpop.f32.mrb[0].mxu0
        %v299 = vadd.f32 0.0, %v298
        %300 = vmatprep.mubr.f32.mxu0 0.0
        %301 = vmatmul.mubr.f32.gmra.mrb[0].mxu0 %v197
        %v302 = vpop.f32.mrb[0].mxu0
        %v303 = vadd.f32 0.0, %v302
        %v304 = vpop.f32.mrb[0].mxu0
        %v305 = vadd.f32 0.0, %v304
        %306 = vdwg.mxu0
        %309 = vrot.lane.b32.xlu0 %v297, 64
        %v310 = vpop.permute.xlu0 %309
        %311 = vrot.lane.b32.xlu0 %v303, 64
        %v312 = vpop.permute.xlu0 %311
        %vm313 = vcmask 64512
        %v314 = vsel %vm313, %v297, 0
        %v316 = vsel %vm313, %v303, 0
        %v318 = vsel %vm313, %v310, 0
        %v320 = vsel %vm313, %v312, 0
        %322 = vmatprep.subr.mxu0 0.0
        %323 = vmatpush1.xpose.msra.mxu0 %v318
        %324 = vmatprep.subr.mxu0 0.0
        %325 = vmatpush1.xpose.msra.mxu0 %v320
        %326 = vmatprep.subr.mxu0 0.0
        %327 = vmatpush1.xpose.msra.mxu0 0.0
        %328 = vmatprep.subr.mxu0 0.0
        %329 = vmatpush1.xpose.msra.mxu0 0.0
        %330 = vmatprep.subr.mxu0 0.0
        %331 = vmatpush1.xpose.msra.mxu0 0.0
        %332 = vmatprep.subr.mxu0 0.0
        %333 = vmatpush1.xpose.msra.mxu0 0.0
        %334 = vmatprep.subr.mxu0 0.0
        %335 = vmatpush1.xpose.msra.mxu0 0.0
        %336 = vmatprep.subr.mxu0 0.0
        %337 = vmatpush1.xpose.msra.mxu0 0.0
        %338 = vmatprep.subr.mxu0 0.0
        %339 = vmatpush1.xpose.msra.mxu0 0.0
        %340 = vmatprep.subr.mxu0 0.0
        %341 = vmatpush1.xpose.msra.mxu0 0.0
        %342 = vmatprep.subr.mxu0 0.0
        %343 = vmatpush1.xpose.msra.mxu0 0.0
        %344 = vmatprep.subr.mxu0 0.0
        %345 = vmatpush1.xpose.msra.mxu0 0.0
        %346 = vmatprep.subr.mxu0 0.0
        %347 = vmatpush1.xpose.msra.mxu0 0.0
        %348 = vmatprep.subr.mxu0 0.0
        %349 = vmatpush1.xpose.msra.mxu0 0.0
        %350 = vmatprep.subr.mxu0 0.0
        %351 = vmatpush1.xpose.msra.mxu0 0.0
        %352 = vmatprep.subr.mxu0 0.0
        %353 = vmatpush1.xpose.msra.mxu0 0.0
        %354 = vmatprep.subr.mxu0 0.0
        %355 = vmatpush1.xpose.msra.mxu0 0.0
        %356 = vmatprep.subr.mxu0 0.0
        %357 = vmatpush1.xpose.msra.mxu0 0.0
        %358 = vmatprep.subr.mxu0 0.0
        %359 = vmatpush1.xpose.msra.mxu0 0.0
        %360 = vmatprep.subr.mxu0 0.0
        %361 = vmatpush1.xpose.msra.mxu0 0.0
        %362 = vmatprep.subr.mxu0 0.0
        %363 = vmatpush1.xpose.msra.mxu0 0.0
        %364 = vmatprep.subr.mxu0 0.0
        %365 = vmatpush1.xpose.msra.mxu0 0.0
        %366 = vmatprep.subr.mxu0 0.0
        %367 = vmatpush1.xpose.msra.mxu0 0.0
        %368 = vmatprep.subr.mxu0 0.0
        %369 = vmatpush1.xpose.msra.mxu0 0.0
        %370 = vmatprep.subr.mxu0 0.0
        %371 = vmatpush1.xpose.msra.mxu0 0.0
        %372 = vmatprep.subr.mxu0 0.0
        %373 = vmatpush1.xpose.msra.mxu0 0.0
        %374 = vmatprep.subr.mxu0 0.0
        %375 = vmatpush1.xpose.msra.mxu0 0.0
        %376 = vmatprep.subr.mxu0 0.0
        %377 = vmatpush1.xpose.msra.mxu0 0.0
        %378 = vmatprep.subr.mxu0 0.0
        %379 = vmatpush1.xpose.msra.mxu0 0.0
        %380 = vmatprep.subr.mxu0 0.0
        %381 = vmatpush1.xpose.msra.mxu0 0.0
        %382 = vmatprep.subr.mxu0 0.0
        %383 = vmatpush1.xpose.msra.mxu0 0.0
        %384 = vmatprep.subr.mxu0 0.0
        %385 = vmatpush1.xpose.msra.mxu0 0.0
        %386 = vmatprep.mubr.f32.mxu0 0.0
        %387 = vmatmul.mubr.f32.gmra.mrb[0].mxu0 %v314
        %v388 = vpop.f32.mrb[0].mxu0
        %v389 = vadd.f32 0.0, %v388
        %v390 = vpop.f32.mrb[0].mxu0
        %391 = vmatprep.mubr.f32.mxu0 0.0
        %392 = vmatmul.mubr.f32.gmra.mrb[0].mxu0 %v316
        %v393 = vpop.f32.mrb[0].mxu0
        %v394 = vadd.f32 0.0, %v393
        %v395 = vpop.f32.mrb[0].mxu0
        %396 = vdwg.mxu0
        %vm397 = vcmask 130048
        %v398 = vsel %vm397, %v389, -inf
        %399 = vmax.xlane.f32.xlu0 %v398
        %v400 = vpop.xlane.xlu0 %399
        %v401 = vsel %vm397, %v394, -inf
        %402 = vmax.xlane.f32.xlu0 %v401
        %v403 = vpop.xlane.xlu0 %402
        %v404 = vsub.f32 %v389, %v400
        %v405 = vsub.f32 %v394, %v403
        %v406 = vmul.f32 %v404, 1.442695
        %v407 = vpow.pop %v406
        %v408 = vmul.f32 %v405, 1.442695
        %v409 = vpow.pop %v408
        %v410 = vsel %vm397, %v407, 0.0
        %411 = vadd.xlane.f32.xlu0 %v410
        %v412 = vpop.xlane.xlu0 %411
        %v413 = vsel %vm397, %v409, 0.0
        %414 = vadd.xlane.f32.xlu0 %v413
        %v415 = vpop.xlane.xlu0 %414
        %v416 = vrcp.pop %v412
        %v417 = vrcp.pop %v415
        %v418 = vmul.f32 %v407, %v416
        %v419 = vmul.f32 %v409, %v417
        %v421 = vsel %vm397, %v418, 0
        %v424 = vsel %vm397, %v419, 0
        %426 = vmatprep.subr.mxu0 0.0
        %427 = vmatpush1.msra.mxu0 %v299
        %428 = vmatprep.subr.mxu0 0.0
        %429 = vmatpush1.msra.mxu0 %v305
        %430 = vmatprep.subr.mxu0 0.0
        %431 = vmatpush1.msra.mxu0 0.0
        %432 = vmatprep.subr.mxu0 0.0
        %433 = vmatpush1.msra.mxu0 0.0
        %434 = vmatprep.subr.mxu0 0.0
        %435 = vmatpush1.msra.mxu0 0.0
        %436 = vmatprep.subr.mxu0 0.0
        %437 = vmatpush1.msra.mxu0 0.0
        %438 = vmatprep.subr.mxu0 0.0
        %439 = vmatpush1.msra.mxu0 0.0
        %440 = vmatprep.subr.mxu0 0.0
        %441 = vmatpush1.msra.mxu0 0.0
        %442 = vmatprep.subr.mxu0 0.0
        %443 = vmatpush1.msra.mxu0 0.0
        %444 = vmatprep.subr.mxu0 0.0
        %445 = vmatpush1.msra.mxu0 0.0
        %446 = vmatprep.subr.mxu0 0.0
        %447 = vmatpush1.msra.mxu0 0.0
        %448 = vmatprep.subr.mxu0 0.0
        %449 = vmatpush1.msra.mxu0 0.0
        %450 = vmatprep.subr.mxu0 0.0
        %451 = vmatpush1.msra.mxu0 0.0
        %452 = vmatprep.subr.mxu0 0.0
        %453 = vmatpush1.msra.mxu0 0.0
        %454 = vmatprep.subr.mxu0 0.0
        %455 = vmatpush1.msra.mxu0 0.0
        %456 = vmatprep.subr.mxu0 0.0
        %457 = vmatpush1.msra.mxu0 0.0
        %458 = vmatprep.subr.mxu0 0.0
        %459 = vmatpush1.msra.mxu0 0.0
        %460 = vmatprep.subr.mxu0 0.0
        %461 = vmatpush1.msra.mxu0 0.0
        %462 = vmatprep.subr.mxu0 0.0
        %463 = vmatpush1.msra.mxu0 0.0
        %464 = vmatprep.subr.mxu0 0.0
        %465 = vmatpush1.msra.mxu0 0.0
        %466 = vmatprep.subr.mxu0 0.0
        %467 = vmatpush1.msra.mxu0 0.0
        %468 = vmatprep.subr.mxu0 0.0
        %469 = vmatpush1.msra.mxu0 0.0
        %470 = vmatprep.subr.mxu0 0.0
        %471 = vmatpush1.msra.mxu0 0.0
        %472 = vmatprep.subr.mxu0 0.0
        %473 = vmatpush1.msra.mxu0 0.0
        %474 = vmatprep.subr.mxu0 0.0
        %475 = vmatpush1.msra.mxu0 0.0
        %476 = vmatprep.subr.mxu0 0.0
        %477 = vmatpush1.msra.mxu0 0.0
        %478 = vmatprep.subr.mxu0 0.0
        %479 = vmatpush1.msra.mxu0 0.0
        %480 = vmatprep.subr.mxu0 0.0
        %481 = vmatpush1.msra.mxu0 0.0
        %482 = vmatprep.subr.mxu0 0.0
        %483 = vmatpush1.msra.mxu0 0.0
        %484 = vmatprep.subr.mxu0 0.0
        %485 = vmatpush1.msra.mxu0 0.0
        %486 = vmatprep.subr.mxu0 0.0
        %487 = vmatpush1.msra.mxu0 0.0
        %488 = vmatprep.subr.mxu0 0.0
        %489 = vmatpush1.msra.mxu0 0.0
        %490 = vmatprep.mubr.f32.mxu0 0.0
        %491 = vmatmul.mubr.f32.gmra.mrb[0].mxu0 %v421
        %v492 = vpop.f32.mrb[0].mxu0
        %v493 = vadd.f32 0.0, %v492
        %v494 = vpop.f32.mrb[0].mxu0
        %495 = vmatprep.mubr.f32.mxu0 0.0
        %496 = vmatmul.mubr.f32.gmra.mrb[0].mxu0 %v424
        %v497 = vpop.f32.mrb[0].mxu0
        %v498 = vadd.f32 0.0, %v497
        %v499 = vpop.f32.mrb[0].mxu0
        %500 = vdwg.mxu0
        %501 = vrot.lane.b32.xlu0 %v297, 120
        %v502 = vpop.permute.xlu0 %501
        %503 = vrot.lane.b32.xlu0 %v303, 120
        %v504 = vpop.permute.xlu0 %503
        %505 = vrot.lane.b32.xlu0 %v297, 56
        %v506 = vpop.permute.xlu0 %505
        %507 = vrot.lane.b32.xlu0 %v303, 56
        %v508 = vpop.permute.xlu0 %507
        %v509 = vsel %vm313, %v502, 0
        %v511 = vsel %vm313, %v504, 0
        %v513 = vsel %vm313, %v506, 0
        %v515 = vsel %vm313, %v508, 0
        %517 = vmatprep.subr.mxu0 0.0
        %518 = vmatpush1.xpose.msra.mxu0 %v513
        %519 = vmatprep.subr.mxu0 0.0
        %520 = vmatpush1.xpose.msra.mxu0 %v515
        %521 = vmatprep.subr.mxu0 0.0
        %522 = vmatpush1.xpose.msra.mxu0 0.0
        %523 = vmatprep.subr.mxu0 0.0
        %524 = vmatpush1.xpose.msra.mxu0 0.0
        %525 = vmatprep.subr.mxu0 0.0
        %526 = vmatpush1.xpose.msra.mxu0 0.0
        %527 = vmatprep.subr.mxu0 0.0
        %528 = vmatpush1.xpose.msra.mxu0 0.0
        %529 = vmatprep.subr.mxu0 0.0
        %530 = vmatpush1.xpose.msra.mxu0 0.0
        %531 = vmatprep.subr.mxu0 0.0
        %532 = vmatpush1.xpose.msra.mxu0 0.0
        %533 = vmatprep.subr.mxu0 0.0
        %534 = vmatpush1.xpose.msra.mxu0 0.0
        %535 = vmatprep.subr.mxu0 0.0
        %536 = vmatpush1.xpose.msra.mxu0 0.0
        %537 = vmatprep.subr.mxu0 0.0
        %538 = vmatpush1.xpose.msra.mxu0 0.0
        %539 = vmatprep.subr.mxu0 0.0
        %540 = vmatpush1.xpose.msra.mxu0 0.0
        %541 = vmatprep.subr.mxu0 0.0
        %542 = vmatpush1.xpose.msra.mxu0 0.0
        %543 = vmatprep.subr.mxu0 0.0
        %544 = vmatpush1.xpose.msra.mxu0 0.0
        %545 = vmatprep.subr.mxu0 0.0
        %546 = vmatpush1.xpose.msra.mxu0 0.0
        %547 = vmatprep.subr.mxu0 0.0
        %548 = vmatpush1.xpose.msra.mxu0 0.0
        %549 = vmatprep.subr.mxu0 0.0
        %550 = vmatpush1.xpose.msra.mxu0 0.0
        %551 = vmatprep.subr.mxu0 0.0
        %552 = vmatpush1.xpose.msra.mxu0 0.0
        %553 = vmatprep.subr.mxu0 0.0
        %554 = vmatpush1.xpose.msra.mxu0 0.0
        %555 = vmatprep.subr.mxu0 0.0
        %556 = vmatpush1.xpose.msra.mxu0 0.0
        %557 = vmatprep.subr.mxu0 0.0
        %558 = vmatpush1.xpose.msra.mxu0 0.0
        %559 = vmatprep.subr.mxu0 0.0
        %560 = vmatpush1.xpose.msra.mxu0 0.0
        %561 = vmatprep.subr.mxu0 0.0
        %562 = vmatpush1.xpose.msra.mxu0 0.0
        %563 = vmatprep.subr.mxu0 0.0
        %564 = vmatpush1.xpose.msra.mxu0 0.0
        %565 = vmatprep.subr.mxu0 0.0
        %566 = vmatpush1.xpose.msra.mxu0 0.0
        %567 = vmatprep.subr.mxu0 0.0
        %568 = vmatpush1.xpose.msra.mxu0 0.0
        %569 = vmatprep.subr.mxu0 0.0
        %570 = vmatpush1.xpose.msra.mxu0 0.0
        %571 = vmatprep.subr.mxu0 0.0
        %572 = vmatpush1.xpose.msra.mxu0 0.0
        %573 = vmatprep.subr.mxu0 0.0
        %574 = vmatpush1.xpose.msra.mxu0 0.0
        %575 = vmatprep.subr.mxu0 0.0
        %576 = vmatpush1.xpose.msra.mxu0 0.0
        %577 = vmatprep.subr.mxu0 0.0
        %578 = vmatpush1.xpose.msra.mxu0 0.0
        %579 = vmatprep.subr.mxu0 0.0
        %580 = vmatpush1.xpose.msra.mxu0 0.0
        %581 = vmatprep.mubr.f32.mxu0 0.0
        %582 = vmatmul.mubr.f32.gmra.mrb[0].mxu0 %v509
        %v583 = vpop.f32.mrb[0].mxu0
        %v584 = vadd.f32 0.0, %v583
        %v585 = vpop.f32.mrb[0].mxu0
        %586 = vmatprep.mubr.f32.mxu0 0.0
        %587 = vmatmul.mubr.f32.gmra.mrb[0].mxu0 %v511
        %v588 = vpop.f32.mrb[0].mxu0
        %v589 = vadd.f32 0.0, %v588
        %v590 = vpop.f32.mrb[0].mxu0
        %591 = vdwg.mxu0
        %v592 = vsel %vm397, %v584, -inf
        %593 = vmax.xlane.f32.xlu0 %v592
        %v594 = vpop.xlane.xlu0 %593
        %v595 = vsel %vm397, %v589, -inf
        %596 = vmax.xlane.f32.xlu0 %v595
        %v597 = vpop.xlane.xlu0 %596
        %v598 = vsub.f32 %v584, %v594
        %v599 = vsub.f32 %v589, %v597
        %v600 = vmul.f32 %v598, 1.442695
        %v601 = vpow.pop %v600
        %v602 = vmul.f32 %v599, 1.442695
        %v603 = vpow.pop %v602
        %v604 = vsel %vm397, %v601, 0.0
        %605 = vadd.xlane.f32.xlu0 %v604
        %v606 = vpop.xlane.xlu0 %605
        %v607 = vsel %vm397, %v603, 0.0
        %608 = vadd.xlane.f32.xlu0 %v607
        %v609 = vpop.xlane.xlu0 %608
        %v610 = vrcp.pop %v606
        %v611 = vrcp.pop %v609
        %v612 = vmul.f32 %v601, %v610
        %v613 = vmul.f32 %v603, %v611
        %616 = vrot.lane.b32.xlu0 %v299, 120
        %v617 = vpop.permute.xlu0 %616
        %618 = vrot.lane.b32.xlu0 %v305, 120
        %v619 = vpop.permute.xlu0 %618
        %v623 = vsel %vm397, %v612, 0
        %v626 = vsel %vm397, %v613, 0
        %628 = vmatprep.subr.mxu0 0.0
        %629 = vmatpush1.msra.mxu0 %v617
        %630 = vmatprep.subr.mxu0 0.0
        %631 = vmatpush1.msra.mxu0 %v619
        %632 = vmatprep.subr.mxu0 0.0
        %633 = vmatpush1.msra.mxu0 0.0
        %634 = vmatprep.subr.mxu0 0.0
        %635 = vmatpush1.msra.mxu0 0.0
        %636 = vmatprep.subr.mxu0 0.0
        %637 = vmatpush1.msra.mxu0 0.0
        %638 = vmatprep.subr.mxu0 0.0
        %639 = vmatpush1.msra.mxu0 0.0
        %640 = vmatprep.subr.mxu0 0.0
        %641 = vmatpush1.msra.mxu0 0.0
        %642 = vmatprep.subr.mxu0 0.0
        %643 = vmatpush1.msra.mxu0 0.0
        %644 = vmatprep.subr.mxu0 0.0
        %645 = vmatpush1.msra.mxu0 0.0
        %646 = vmatprep.subr.mxu0 0.0
        %647 = vmatpush1.msra.mxu0 0.0
        %648 = vmatprep.subr.mxu0 0.0
        %649 = vmatpush1.msra.mxu0 0.0
        %650 = vmatprep.subr.mxu0 0.0
        %651 = vmatpush1.msra.mxu0 0.0
        %652 = vmatprep.subr.mxu0 0.0
        %653 = vmatpush1.msra.mxu0 0.0
        %654 = vmatprep.subr.mxu0 0.0
        %655 = vmatpush1.msra.mxu0 0.0
        %656 = vmatprep.subr.mxu0 0.0
        %657 = vmatpush1.msra.mxu0 0.0
        %658 = vmatprep.subr.mxu0 0.0
        %659 = vmatpush1.msra.mxu0 0.0
        %660 = vmatprep.subr.mxu0 0.0
        %661 = vmatpush1.msra.mxu0 0.0
        %662 = vmatprep.subr.mxu0 0.0
        %663 = vmatpush1.msra.mxu0 0.0
        %664 = vmatprep.subr.mxu0 0.0
        %665 = vmatpush1.msra.mxu0 0.0
        %666 = vmatprep.subr.mxu0 0.0
        %667 = vmatpush1.msra.mxu0 0.0
        %668 = vmatprep.subr.mxu0 0.0
        %669 = vmatpush1.msra.mxu0 0.0
        %670 = vmatprep.subr.mxu0 0.0
        %671 = vmatpush1.msra.mxu0 0.0
        %672 = vmatprep.subr.mxu0 0.0
        %673 = vmatpush1.msra.mxu0 0.0
        %674 = vmatprep.subr.mxu0 0.0
        %675 = vmatpush1.msra.mxu0 0.0
        %676 = vmatprep.subr.mxu0 0.0
        %677 = vmatpush1.msra.mxu0 0.0
        %678 = vmatprep.subr.mxu0 0.0
        %679 = vmatpush1.msra.mxu0 0.0
        %680 = vmatprep.subr.mxu0 0.0
        %681 = vmatpush1.msra.mxu0 0.0
        %682 = vmatprep.subr.mxu0 0.0
        %683 = vmatpush1.msra.mxu0 0.0
        %684 = vmatprep.subr.mxu0 0.0
        %685 = vmatpush1.msra.mxu0 0.0
        %686 = vmatprep.subr.mxu0 0.0
        %687 = vmatpush1.msra.mxu0 0.0
        %688 = vmatprep.subr.mxu0 0.0
        %689 = vmatpush1.msra.mxu0 0.0
        %690 = vmatprep.subr.mxu0 0.0
        %691 = vmatpush1.msra.mxu0 0.0
        %692 = vmatprep.mubr.f32.mxu0 0.0
        %693 = vmatmul.mubr.f32.gmra.mrb[0].mxu0 %v623
        %v694 = vpop.f32.mrb[0].mxu0
        %v695 = vadd.f32 0.0, %v694
        %v696 = vpop.f32.mrb[0].mxu0
        %697 = vmatprep.mubr.f32.mxu0 0.0
        %698 = vmatmul.mubr.f32.gmra.mrb[0].mxu0 %v626
        %v699 = vpop.f32.mrb[0].mxu0
        %v700 = vadd.f32 0.0, %v699
        %v701 = vpop.f32.mrb[0].mxu0
        %702 = vdwg.mxu0
        %703 = vrot.lane.b32.xlu0 %v297, 112
        %v704 = vpop.permute.xlu0 %703
        %705 = vrot.lane.b32.xlu0 %v303, 112
        %v706 = vpop.permute.xlu0 %705
        %707 = vrot.lane.b32.xlu0 %v297, 48
        %v708 = vpop.permute.xlu0 %707
        %709 = vrot.lane.b32.xlu0 %v303, 48
        %v710 = vpop.permute.xlu0 %709
        %v711 = vsel %vm313, %v704, 0
        %v713 = vsel %vm313, %v706, 0
        %v715 = vsel %vm313, %v708, 0
        %v717 = vsel %vm313, %v710, 0
        %719 = vmatprep.subr.mxu0 0.0
        %720 = vmatpush1.xpose.msra.mxu0 %v715
        %721 = vmatprep.subr.mxu0 0.0
        %722 = vmatpush1.xpose.msra.mxu0 %v717
        %723 = vmatprep.subr.mxu0 0.0
        %724 = vmatpush1.xpose.msra.mxu0 0.0
        %725 = vmatprep.subr.mxu0 0.0
        %726 = vmatpush1.xpose.msra.mxu0 0.0
        %727 = vmatprep.subr.mxu0 0.0
        %728 = vmatpush1.xpose.msra.mxu0 0.0
        %729 = vmatprep.subr.mxu0 0.0
        %730 = vmatpush1.xpose.msra.mxu0 0.0
        %731 = vmatprep.subr.mxu0 0.0
        %732 = vmatpush1.xpose.msra.mxu0 0.0
        %733 = vmatprep.subr.mxu0 0.0
        %734 = vmatpush1.xpose.msra.mxu0 0.0
        %735 = vmatprep.subr.mxu0 0.0
        %736 = vmatpush1.xpose.msra.mxu0 0.0
        %737 = vmatprep.subr.mxu0 0.0
        %738 = vmatpush1.xpose.msra.mxu0 0.0
        %739 = vmatprep.subr.mxu0 0.0
        %740 = vmatpush1.xpose.msra.mxu0 0.0
        %741 = vmatprep.subr.mxu0 0.0
        %742 = vmatpush1.xpose.msra.mxu0 0.0
        %743 = vmatprep.subr.mxu0 0.0
        %744 = vmatpush1.xpose.msra.mxu0 0.0
        %745 = vmatprep.subr.mxu0 0.0
        %746 = vmatpush1.xpose.msra.mxu0 0.0
        %747 = vmatprep.subr.mxu0 0.0
        %748 = vmatpush1.xpose.msra.mxu0 0.0
        %749 = vmatprep.subr.mxu0 0.0
        %750 = vmatpush1.xpose.msra.mxu0 0.0
        %751 = vmatprep.subr.mxu0 0.0
        %752 = vmatpush1.xpose.msra.mxu0 0.0
        %753 = vmatprep.subr.mxu0 0.0
        %754 = vmatpush1.xpose.msra.mxu0 0.0
        %755 = vmatprep.subr.mxu0 0.0
        %756 = vmatpush1.xpose.msra.mxu0 0.0
        %757 = vmatprep.subr.mxu0 0.0
        %758 = vmatpush1.xpose.msra.mxu0 0.0
        %759 = vmatprep.subr.mxu0 0.0
        %760 = vmatpush1.xpose.msra.mxu0 0.0
        %761 = vmatprep.subr.mxu0 0.0
        %762 = vmatpush1.xpose.msra.mxu0 0.0
        %763 = vmatprep.subr.mxu0 0.0
        %764 = vmatpush1.xpose.msra.mxu0 0.0
        %765 = vmatprep.subr.mxu0 0.0
        %766 = vmatpush1.xpose.msra.mxu0 0.0
        %767 = vmatprep.subr.mxu0 0.0
        %768 = vmatpush1.xpose.msra.mxu0 0.0
        %769 = vmatprep.subr.mxu0 0.0
        %770 = vmatpush1.xpose.msra.mxu0 0.0
        %771 = vmatprep.subr.mxu0 0.0
        %772 = vmatpush1.xpose.msra.mxu0 0.0
        %773 = vmatprep.subr.mxu0 0.0
        %774 = vmatpush1.xpose.msra.mxu0 0.0
        %775 = vmatprep.subr.mxu0 0.0
        %776 = vmatpush1.xpose.msra.mxu0 0.0
        %777 = vmatprep.subr.mxu0 0.0
        %778 = vmatpush1.xpose.msra.mxu0 0.0
        %779 = vmatprep.subr.mxu0 0.0
        %780 = vmatpush1.xpose.msra.mxu0 0.0
        %781 = vmatprep.subr.mxu0 0.0
        %782 = vmatpush1.xpose.msra.mxu0 0.0
        %783 = vmatprep.mubr.f32.mxu0 0.0
        %784 = vmatmul.mubr.f32.gmra.mrb[0].mxu0 %v711
        %v785 = vpop.f32.mrb[0].mxu0
        %v786 = vadd.f32 0.0, %v785
        %v787 = vpop.f32.mrb[0].mxu0
        %788 = vmatprep.mubr.f32.mxu0 0.0
        %789 = vmatmul.mubr.f32.gmra.mrb[0].mxu0 %v713
        %v790 = vpop.f32.mrb[0].mxu0
        %v791 = vadd.f32 0.0, %v790
        %v792 = vpop.f32.mrb[0].mxu0
        %793 = vdwg.mxu0
        %v794 = vsel %vm397, %v786, -inf
        %795 = vmax.xlane.f32.xlu0 %v794
        %v796 = vpop.xlane.xlu0 %795
        %v797 = vsel %vm397, %v791, -inf
        %798 = vmax.xlane.f32.xlu0 %v797
        %v799 = vpop.xlane.xlu0 %798
        %v800 = vsub.f32 %v786, %v796
        %v801 = vsub.f32 %v791, %v799
        %v802 = vmul.f32 %v800, 1.442695
        %v803 = vpow.pop %v802
        %v804 = vmul.f32 %v801, 1.442695
        %v805 = vpow.pop %v804
        %v806 = vsel %vm397, %v803, 0.0
        %807 = vadd.xlane.f32.xlu0 %v806
        %v808 = vpop.xlane.xlu0 %807
        %v809 = vsel %vm397, %v805, 0.0
        %810 = vadd.xlane.f32.xlu0 %v809
        %v811 = vpop.xlane.xlu0 %810
        %v812 = vrcp.pop %v808
        %v813 = vrcp.pop %v811
        %v814 = vmul.f32 %v803, %v812
        %v815 = vmul.f32 %v805, %v813
        %816 = vrot.lane.b32.xlu0 %v299, 112
        %v817 = vpop.permute.xlu0 %816
        %818 = vrot.lane.b32.xlu0 %v305, 112
        %v819 = vpop.permute.xlu0 %818
        %v823 = vsel %vm397, %v814, 0
        %v826 = vsel %vm397, %v815, 0
        %828 = vmatprep.subr.mxu0 0.0
        %829 = vmatpush1.msra.mxu0 %v817
        %830 = vmatprep.subr.mxu0 0.0
        %831 = vmatpush1.msra.mxu0 %v819
        %832 = vmatprep.subr.mxu0 0.0
        %833 = vmatpush1.msra.mxu0 0.0
        %834 = vmatprep.subr.mxu0 0.0
        %835 = vmatpush1.msra.mxu0 0.0
        %836 = vmatprep.subr.mxu0 0.0
        %837 = vmatpush1.msra.mxu0 0.0
        %838 = vmatprep.subr.mxu0 0.0
        %839 = vmatpush1.msra.mxu0 0.0
        %840 = vmatprep.subr.mxu0 0.0
        %841 = vmatpush1.msra.mxu0 0.0
        %842 = vmatprep.subr.mxu0 0.0
        %843 = vmatpush1.msra.mxu0 0.0
        %844 = vmatprep.subr.mxu0 0.0
        %845 = vmatpush1.msra.mxu0 0.0
        %846 = vmatprep.subr.mxu0 0.0
        %847 = vmatpush1.msra.mxu0 0.0
        %848 = vmatprep.subr.mxu0 0.0
        %849 = vmatpush1.msra.mxu0 0.0
        %850 = vmatprep.subr.mxu0 0.0
        %851 = vmatpush1.msra.mxu0 0.0
        %852 = vmatprep.subr.mxu0 0.0
        %853 = vmatpush1.msra.mxu0 0.0
        %854 = vmatprep.subr.mxu0 0.0
        %855 = vmatpush1.msra.mxu0 0.0
        %856 = vmatprep.subr.mxu0 0.0
        %857 = vmatpush1.msra.mxu0 0.0
        %858 = vmatprep.subr.mxu0 0.0
        %859 = vmatpush1.msra.mxu0 0.0
        %860 = vmatprep.subr.mxu0 0.0
        %861 = vmatpush1.msra.mxu0 0.0
        %862 = vmatprep.subr.mxu0 0.0
        %863 = vmatpush1.msra.mxu0 0.0
        %864 = vmatprep.subr.mxu0 0.0
        %865 = vmatpush1.msra.mxu0 0.0
        %866 = vmatprep.subr.mxu0 0.0
        %867 = vmatpush1.msra.mxu0 0.0
        %868 = vmatprep.subr.mxu0 0.0
        %869 = vmatpush1.msra.mxu0 0.0
        %870 = vmatprep.subr.mxu0 0.0
        %871 = vmatpush1.msra.mxu0 0.0
        %872 = vmatprep.subr.mxu0 0.0
        %873 = vmatpush1.msra.mxu0 0.0
        %874 = vmatprep.subr.mxu0 0.0
        %875 = vmatpush1.msra.mxu0 0.0
        %876 = vmatprep.subr.mxu0 0.0
        %877 = vmatpush1.msra.mxu0 0.0
        %878 = vmatprep.subr.mxu0 0.0
        %879 = vmatpush1.msra.mxu0 0.0
        %880 = vmatprep.subr.mxu0 0.0
        %881 = vmatpush1.msra.mxu0 0.0
        %882 = vmatprep.subr.mxu0 0.0
        %883 = vmatpush1.msra.mxu0 0.0
        %884 = vmatprep.subr.mxu0 0.0
        %885 = vmatpush1.msra.mxu0 0.0
        %886 = vmatprep.subr.mxu0 0.0
        %887 = vmatpush1.msra.mxu0 0.0
        %888 = vmatprep.subr.mxu0 0.0
        %889 = vmatpush1.msra.mxu0 0.0
        %890 = vmatprep.subr.mxu0 0.0
        %891 = vmatpush1.msra.mxu0 0.0
        %892 = vmatprep.mubr.f32.mxu0 0.0
        %893 = vmatmul.mubr.f32.gmra.mrb[0].mxu0 %v823
        %v894 = vpop.f32.mrb[0].mxu0
        %v895 = vadd.f32 0.0, %v894
        %v896 = vpop.f32.mrb[0].mxu0
        %897 = vmatprep.mubr.f32.mxu0 0.0
        %898 = vmatmul.mubr.f32.gmra.mrb[0].mxu0 %v826
        %v899 = vpop.f32.mrb[0].mxu0
        %v900 = vadd.f32 0.0, %v899
        %v901 = vpop.f32.mrb[0].mxu0
        %902 = vdwg.mxu0
        %903 = vrot.lane.b32.xlu0 %v297, 104
        %v904 = vpop.permute.xlu0 %903
        %905 = vrot.lane.b32.xlu0 %v303, 104
        %v906 = vpop.permute.xlu0 %905
        %907 = vrot.lane.b32.xlu0 %v297, 40
        %v908 = vpop.permute.xlu0 %907
        %909 = vrot.lane.b32.xlu0 %v303, 40
        %v910 = vpop.permute.xlu0 %909
        %v911 = vsel %vm313, %v904, 0
        %v913 = vsel %vm313, %v906, 0
        %v915 = vsel %vm313, %v908, 0
        %v917 = vsel %vm313, %v910, 0
        %919 = vmatprep.subr.mxu0 0.0
        %920 = vmatpush1.xpose.msra.mxu0 %v915
        %921 = vmatprep.subr.mxu0 0.0
        %922 = vmatpush1.xpose.msra.mxu0 %v917
        %923 = vmatprep.subr.mxu0 0.0
        %924 = vmatpush1.xpose.msra.mxu0 0.0
        %925 = vmatprep.subr.mxu0 0.0
        %926 = vmatpush1.xpose.msra.mxu0 0.0
        %927 = vmatprep.subr.mxu0 0.0
        %928 = vmatpush1.xpose.msra.mxu0 0.0
        %929 = vmatprep.subr.mxu0 0.0
        %930 = vmatpush1.xpose.msra.mxu0 0.0
        %931 = vmatprep.subr.mxu0 0.0
        %932 = vmatpush1.xpose.msra.mxu0 0.0
        %933 = vmatprep.subr.mxu0 0.0
        %934 = vmatpush1.xpose.msra.mxu0 0.0
        %935 = vmatprep.subr.mxu0 0.0
        %936 = vmatpush1.xpose.msra.mxu0 0.0
        %937 = vmatprep.subr.mxu0 0.0
        %938 = vmatpush1.xpose.msra.mxu0 0.0
        %939 = vmatprep.subr.mxu0 0.0
        %940 = vmatpush1.xpose.msra.mxu0 0.0
        %941 = vmatprep.subr.mxu0 0.0
        %942 = vmatpush1.xpose.msra.mxu0 0.0
        %943 = vmatprep.subr.mxu0 0.0
        %944 = vmatpush1.xpose.msra.mxu0 0.0
        %945 = vmatprep.subr.mxu0 0.0
        %946 = vmatpush1.xpose.msra.mxu0 0.0
        %947 = vmatprep.subr.mxu0 0.0
        %948 = vmatpush1.xpose.msra.mxu0 0.0
        %949 = vmatprep.subr.mxu0 0.0
        %950 = vmatpush1.xpose.msra.mxu0 0.0
        %951 = vmatprep.subr.mxu0 0.0
        %952 = vmatpush1.xpose.msra.mxu0 0.0
        %953 = vmatprep.subr.mxu0 0.0
        %954 = vmatpush1.xpose.msra.mxu0 0.0
        %955 = vmatprep.subr.mxu0 0.0
        %956 = vmatpush1.xpose.msra.mxu0 0.0
        %957 = vmatprep.subr.mxu0 0.0
        %958 = vmatpush1.xpose.msra.mxu0 0.0
        %959 = vmatprep.subr.mxu0 0.0
        %960 = vmatpush1.xpose.msra.mxu0 0.0
        %961 = vmatprep.subr.mxu0 0.0
        %962 = vmatpush1.xpose.msra.mxu0 0.0
        %963 = vmatprep.subr.mxu0 0.0
        %964 = vmatpush1.xpose.msra.mxu0 0.0
        %965 = vmatprep.subr.mxu0 0.0
        %966 = vmatpush1.xpose.msra.mxu0 0.0
        %967 = vmatprep.subr.mxu0 0.0
        %968 = vmatpush1.xpose.msra.mxu0 0.0
        %969 = vmatprep.subr.mxu0 0.0
        %970 = vmatpush1.xpose.msra.mxu0 0.0
        %971 = vmatprep.subr.mxu0 0.0
        %972 = vmatpush1.xpose.msra.mxu0 0.0
        %973 = vmatprep.subr.mxu0 0.0
        %974 = vmatpush1.xpose.msra.mxu0 0.0
        %975 = vmatprep.subr.mxu0 0.0
        %976 = vmatpush1.xpose.msra.mxu0 0.0
        %977 = vmatprep.subr.mxu0 0.0
        %978 = vmatpush1.xpose.msra.mxu0 0.0
        %979 = vmatprep.subr.mxu0 0.0
        %980 = vmatpush1.xpose.msra.mxu0 0.0
        %981 = vmatprep.subr.mxu0 0.0
        %982 = vmatpush1.xpose.msra.mxu0 0.0
        %983 = vmatprep.mubr.f32.mxu0 0.0
        %984 = vmatmul.mubr.f32.gmra.mrb[0].mxu0 %v911
        %v985 = vpop.f32.mrb[0].mxu0
        %v986 = vadd.f32 0.0, %v985
        %v987 = vpop.f32.mrb[0].mxu0
        %988 = vmatprep.mubr.f32.mxu0 0.0
        %989 = vmatmul.mubr.f32.gmra.mrb[0].mxu0 %v913
        %v990 = vpop.f32.mrb[0].mxu0
        %v991 = vadd.f32 0.0, %v990
        %v992 = vpop.f32.mrb[0].mxu0
        %993 = vdwg.mxu0
        %v994 = vsel %vm397, %v986, -inf
        %995 = vmax.xlane.f32.xlu0 %v994
        %v996 = vpop.xlane.xlu0 %995
        %v997 = vsel %vm397, %v991, -inf
        %998 = vmax.xlane.f32.xlu0 %v997
        %v999 = vpop.xlane.xlu0 %998
        %v1000 = vsub.f32 %v986, %v996
        %v1001 = vsub.f32 %v991, %v999
        %v1002 = vmul.f32 %v1000, 1.442695
        %v1003 = vpow.pop %v1002
        %v1004 = vmul.f32 %v1001, 1.442695
        %v1005 = vpow.pop %v1004
        %v1006 = vsel %vm397, %v1003, 0.0
        %1007 = vadd.xlane.f32.xlu0 %v1006
        %v1008 = vpop.xlane.xlu0 %1007
        %v1009 = vsel %vm397, %v1005, 0.0
        %1010 = vadd.xlane.f32.xlu0 %v1009
        %v1011 = vpop.xlane.xlu0 %1010
        %v1012 = vrcp.pop %v1008
        %v1013 = vrcp.pop %v1011
        %v1014 = vmul.f32 %v1003, %v1012
        %v1015 = vmul.f32 %v1005, %v1013
        %1016 = vrot.lane.b32.xlu0 %v299, 104
        %v1017 = vpop.permute.xlu0 %1016
        %1018 = vrot.lane.b32.xlu0 %v305, 104
        %v1019 = vpop.permute.xlu0 %1018
        %v1023 = vsel %vm397, %v1014, 0
        %v1026 = vsel %vm397, %v1015, 0
        %1028 = vmatprep.subr.mxu0 0.0
        %1029 = vmatpush1.msra.mxu0 %v1017
        %1030 = vmatprep.subr.mxu0 0.0
        %1031 = vmatpush1.msra.mxu0 %v1019
        %1032 = vmatprep.subr.mxu0 0.0
        %1033 = vmatpush1.msra.mxu0 0.0
        %1034 = vmatprep.subr.mxu0 0.0
        %1035 = vmatpush1.msra.mxu0 0.0
        %1036 = vmatprep.subr.mxu0 0.0
        %1037 = vmatpush1.msra.mxu0 0.0
        %1038 = vmatprep.subr.mxu0 0.0
        %1039 = vmatpush1.msra.mxu0 0.0
        %1040 = vmatprep.subr.mxu0 0.0
        %1041 = vmatpush1.msra.mxu0 0.0
        %1042 = vmatprep.subr.mxu0 0.0
        %1043 = vmatpush1.msra.mxu0 0.0
        %1044 = vmatprep.subr.mxu0 0.0
        %1045 = vmatpush1.msra.mxu0 0.0
        %1046 = vmatprep.subr.mxu0 0.0
        %1047 = vmatpush1.msra.mxu0 0.0
        %1048 = vmatprep.subr.mxu0 0.0
        %1049 = vmatpush1.msra.mxu0 0.0
        %1050 = vmatprep.subr.mxu0 0.0
        %1051 = vmatpush1.msra.mxu0 0.0
        %1052 = vmatprep.subr.mxu0 0.0
        %1053 = vmatpush1.msra.mxu0 0.0
        %1054 = vmatprep.subr.mxu0 0.0
        %1055 = vmatpush1.msra.mxu0 0.0
        %1056 = vmatprep.subr.mxu0 0.0
        %1057 = vmatpush1.msra.mxu0 0.0
        %1058 = vmatprep.subr.mxu0 0.0
        %1059 = vmatpush1.msra.mxu0 0.0
        %1060 = vmatprep.subr.mxu0 0.0
        %1061 = vmatpush1.msra.mxu0 0.0
        %1062 = vmatprep.subr.mxu0 0.0
        %1063 = vmatpush1.msra.mxu0 0.0
        %1064 = vmatprep.subr.mxu0 0.0
        %1065 = vmatpush1.msra.mxu0 0.0
        %1066 = vmatprep.subr.mxu0 0.0
        %1067 = vmatpush1.msra.mxu0 0.0
        %1068 = vmatprep.subr.mxu0 0.0
        %1069 = vmatpush1.msra.mxu0 0.0
        %1070 = vmatprep.subr.mxu0 0.0
        %1071 = vmatpush1.msra.mxu0 0.0
        %1072 = vmatprep.subr.mxu0 0.0
        %1073 = vmatpush1.msra.mxu0 0.0
        %1074 = vmatprep.subr.mxu0 0.0
        %1075 = vmatpush1.msra.mxu0 0.0
        %1076 = vmatprep.subr.mxu0 0.0
        %1077 = vmatpush1.msra.mxu0 0.0
        %1078 = vmatprep.subr.mxu0 0.0
        %1079 = vmatpush1.msra.mxu0 0.0
        %1080 = vmatprep.subr.mxu0 0.0
        %1081 = vmatpush1.msra.mxu0 0.0
        %1082 = vmatprep.subr.mxu0 0.0
        %1083 = vmatpush1.msra.mxu0 0.0
        %1084 = vmatprep.subr.mxu0 0.0
        %1085 = vmatpush1.msra.mxu0 0.0
        %1086 = vmatprep.subr.mxu0 0.0
        %1087 = vmatpush1.msra.mxu0 0.0
        %1088 = vmatprep.subr.mxu0 0.0
        %1089 = vmatpush1.msra.mxu0 0.0
        %1090 = vmatprep.subr.mxu0 0.0
        %1091 = vmatpush1.msra.mxu0 0.0
        %1092 = vmatprep.mubr.f32.mxu0 0.0
        %1093 = vmatmul.mubr.f32.gmra.mrb[0].mxu0 %v1023
        %v1094 = vpop.f32.mrb[0].mxu0
        %v1095 = vadd.f32 0.0, %v1094
        %v1096 = vpop.f32.mrb[0].mxu0
        %1097 = vmatprep.mubr.f32.mxu0 0.0
        %1098 = vmatmul.mubr.f32.gmra.mrb[0].mxu0 %v1026
        %v1099 = vpop.f32.mrb[0].mxu0
        %v1100 = vadd.f32 0.0, %v1099
        %v1101 = vpop.f32.mrb[0].mxu0
        %1102 = vdwg.mxu0
        %1103 = vrot.lane.b32.xlu0 %v297, 96
        %v1104 = vpop.permute.xlu0 %1103
        %1105 = vrot.lane.b32.xlu0 %v303, 96
        %v1106 = vpop.permute.xlu0 %1105
        %1107 = vrot.lane.b32.xlu0 %v297, 32
        %v1108 = vpop.permute.xlu0 %1107
        %1109 = vrot.lane.b32.xlu0 %v303, 32
        %v1110 = vpop.permute.xlu0 %1109
        %v1111 = vsel %vm313, %v1104, 0
        %v1113 = vsel %vm313, %v1106, 0
        %v1115 = vsel %vm313, %v1108, 0
        %v1117 = vsel %vm313, %v1110, 0
        %1119 = vmatprep.subr.mxu0 0.0
        %1120 = vmatpush1.xpose.msra.mxu0 %v1115
        %1121 = vmatprep.subr.mxu0 0.0
        %1122 = vmatpush1.xpose.msra.mxu0 %v1117
        %1123 = vmatprep.subr.mxu0 0.0
        %1124 = vmatpush1.xpose.msra.mxu0 0.0
        %1125 = vmatprep.subr.mxu0 0.0
        %1126 = vmatpush1.xpose.msra.mxu0 0.0
        %1127 = vmatprep.subr.mxu0 0.0
        %1128 = vmatpush1.xpose.msra.mxu0 0.0
        %1129 = vmatprep.subr.mxu0 0.0
        %1130 = vmatpush1.xpose.msra.mxu0 0.0
        %1131 = vmatprep.subr.mxu0 0.0
        %1132 = vmatpush1.xpose.msra.mxu0 0.0
        %1133 = vmatprep.subr.mxu0 0.0
        %1134 = vmatpush1.xpose.msra.mxu0 0.0
        %1135 = vmatprep.subr.mxu0 0.0
        %1136 = vmatpush1.xpose.msra.mxu0 0.0
        %1137 = vmatprep.subr.mxu0 0.0
        %1138 = vmatpush1.xpose.msra.mxu0 0.0
        %1139 = vmatprep.subr.mxu0 0.0
        %1140 = vmatpush1.xpose.msra.mxu0 0.0
        %1141 = vmatprep.subr.mxu0 0.0
        %1142 = vmatpush1.xpose.msra.mxu0 0.0
        %1143 = vmatprep.subr.mxu0 0.0
        %1144 = vmatpush1.xpose.msra.mxu0 0.0
        %1145 = vmatprep.subr.mxu0 0.0
        %1146 = vmatpush1.xpose.msra.mxu0 0.0
        %1147 = vmatprep.subr.mxu0 0.0
        %1148 = vmatpush1.xpose.msra.mxu0 0.0
        %1149 = vmatprep.subr.mxu0 0.0
        %1150 = vmatpush1.xpose.msra.mxu0 0.0
        %1151 = vmatprep.subr.mxu0 0.0
        %1152 = vmatpush1.xpose.msra.mxu0 0.0
        %1153 = vmatprep.subr.mxu0 0.0
        %1154 = vmatpush1.xpose.msra.mxu0 0.0
        %1155 = vmatprep.subr.mxu0 0.0
        %1156 = vmatpush1.xpose.msra.mxu0 0.0
        %1157 = vmatprep.subr.mxu0 0.0
        %1158 = vmatpush1.xpose.msra.mxu0 0.0
        %1159 = vmatprep.subr.mxu0 0.0
        %1160 = vmatpush1.xpose.msra.mxu0 0.0
        %1161 = vmatprep.subr.mxu0 0.0
        %1162 = vmatpush1.xpose.msra.mxu0 0.0
        %1163 = vmatprep.subr.mxu0 0.0
        %1164 = vmatpush1.xpose.msra.mxu0 0.0
        %1165 = vmatprep.subr.mxu0 0.0
        %1166 = vmatpush1.xpose.msra.mxu0 0.0
        %1167 = vmatprep.subr.mxu0 0.0
        %1168 = vmatpush1.xpose.msra.mxu0 0.0
        %1169 = vmatprep.subr.mxu0 0.0
        %1170 = vmatpush1.xpose.msra.mxu0 0.0
        %1171 = vmatprep.subr.mxu0 0.0
        %1172 = vmatpush1.xpose.msra.mxu0 0.0
        %1173 = vmatprep.subr.mxu0 0.0
        %1174 = vmatpush1.xpose.msra.mxu0 0.0
        %1175 = vmatprep.subr.mxu0 0.0
        %1176 = vmatpush1.xpose.msra.mxu0 0.0
        %1177 = vmatprep.subr.mxu0 0.0
        %1178 = vmatpush1.xpose.msra.mxu0 0.0
        %1179 = vmatprep.subr.mxu0 0.0
        %1180 = vmatpush1.xpose.msra.mxu0 0.0
        %1181 = vmatprep.subr.mxu0 0.0
        %1182 = vmatpush1.xpose.msra.mxu0 0.0
        %1183 = vmatprep.mubr.f32.mxu0 0.0
        %1184 = vmatmul.mubr.f32.gmra.mrb[0].mxu0 %v1111
        %v1185 = vpop.f32.mrb[0].mxu0
        %v1186 = vadd.f32 0.0, %v1185
        %v1187 = vpop.f32.mrb[0].mxu0
        %1188 = vmatprep.mubr.f32.mxu0 0.0
        %1189 = vmatmul.mubr.f32.gmra.mrb[0].mxu0 %v1113
        %v1190 = vpop.f32.mrb[0].mxu0
        %v1191 = vadd.f32 0.0, %v1190
        %v1192 = vpop.f32.mrb[0].mxu0
        %1193 = vdwg.mxu0
        %v1194 = vsel %vm397, %v1186, -inf
        %1195 = vmax.xlane.f32.xlu0 %v1194
        %v1196 = vpop.xlane.xlu0 %1195
        %v1197 = vsel %vm397, %v1191, -inf
        %1198 = vmax.xlane.f32.xlu0 %v1197
        %v1199 = vpop.xlane.xlu0 %1198
        %v1200 = vsub.f32 %v1186, %v1196
        %v1201 = vsub.f32 %v1191, %v1199
        %v1202 = vmul.f32 %v1200, 1.442695
        %v1203 = vpow.pop %v1202
        %v1204 = vmul.f32 %v1201, 1.442695
        %v1205 = vpow.pop %v1204
        %v1206 = vsel %vm397, %v1203, 0.0
        %1207 = vadd.xlane.f32.xlu0 %v1206
        %v1208 = vpop.xlane.xlu0 %1207
        %v1209 = vsel %vm397, %v1205, 0.0
        %1210 = vadd.xlane.f32.xlu0 %v1209
        %v1211 = vpop.xlane.xlu0 %1210
        %v1212 = vrcp.pop %v1208
        %v1213 = vrcp.pop %v1211
        %v1214 = vmul.f32 %v1203, %v1212
        %v1215 = vmul.f32 %v1205, %v1213
        %1216 = vrot.lane.b32.xlu0 %v299, 96
        %v1217 = vpop.permute.xlu0 %1216
        %1218 = vrot.lane.b32.xlu0 %v305, 96
        %v1219 = vpop.permute.xlu0 %1218
        %v1223 = vsel %vm397, %v1214, 0
        %v1226 = vsel %vm397, %v1215, 0
        %1228 = vmatprep.subr.mxu0 0.0
        %1229 = vmatpush1.msra.mxu0 %v1217
        %1230 = vmatprep.subr.mxu0 0.0
        %1231 = vmatpush1.msra.mxu0 %v1219
        %1232 = vmatprep.subr.mxu0 0.0
        %1233 = vmatpush1.msra.mxu0 0.0
        %1234 = vmatprep.subr.mxu0 0.0
        %1235 = vmatpush1.msra.mxu0 0.0
        %1236 = vmatprep.subr.mxu0 0.0
        %1237 = vmatpush1.msra.mxu0 0.0
        %1238 = vmatprep.subr.mxu0 0.0
        %1239 = vmatpush1.msra.mxu0 0.0
        %1240 = vmatprep.subr.mxu0 0.0
        %1241 = vmatpush1.msra.mxu0 0.0
        %1242 = vmatprep.subr.mxu0 0.0
        %1243 = vmatpush1.msra.mxu0 0.0
        %1244 = vmatprep.subr.mxu0 0.0
        %1245 = vmatpush1.msra.mxu0 0.0
        %1246 = vmatprep.subr.mxu0 0.0
        %1247 = vmatpush1.msra.mxu0 0.0
        %1248 = vmatprep.subr.mxu0 0.0
        %1249 = vmatpush1.msra.mxu0 0.0
        %1250 = vmatprep.subr.mxu0 0.0
        %1251 = vmatpush1.msra.mxu0 0.0
        %1252 = vmatprep.subr.mxu0 0.0
        %1253 = vmatpush1.msra.mxu0 0.0
        %1254 = vmatprep.subr.mxu0 0.0
        %1255 = vmatpush1.msra.mxu0 0.0
        %1256 = vmatprep.subr.mxu0 0.0
        %1257 = vmatpush1.msra.mxu0 0.0
        %1258 = vmatprep.subr.mxu0 0.0
        %1259 = vmatpush1.msra.mxu0 0.0
        %1260 = vmatprep.subr.mxu0 0.0
        %1261 = vmatpush1.msra.mxu0 0.0
        %1262 = vmatprep.subr.mxu0 0.0
        %1263 = vmatpush1.msra.mxu0 0.0
        %1264 = vmatprep.subr.mxu0 0.0
        %1265 = vmatpush1.msra.mxu0 0.0
        %1266 = vmatprep.subr.mxu0 0.0
        %1267 = vmatpush1.msra.mxu0 0.0
        %1268 = vmatprep.subr.mxu0 0.0
        %1269 = vmatpush1.msra.mxu0 0.0
        %1270 = vmatprep.subr.mxu0 0.0
        %1271 = vmatpush1.msra.mxu0 0.0
        %1272 = vmatprep.subr.mxu0 0.0
        %1273 = vmatpush1.msra.mxu0 0.0
        %1274 = vmatprep.subr.mxu0 0.0
        %1275 = vmatpush1.msra.mxu0 0.0
        %1276 = vmatprep.subr.mxu0 0.0
        %1277 = vmatpush1.msra.mxu0 0.0
        %1278 = vmatprep.subr.mxu0 0.0
        %1279 = vmatpush1.msra.mxu0 0.0
        %1280 = vmatprep.subr.mxu0 0.0
        %1281 = vmatpush1.msra.mxu0 0.0
        %1282 = vmatprep.subr.mxu0 0.0
        %1283 = vmatpush1.msra.mxu0 0.0
        %1284 = vmatprep.subr.mxu0 0.0
        %1285 = vmatpush1.msra.mxu0 0.0
        %1286 = vmatprep.subr.mxu0 0.0
        %1287 = vmatpush1.msra.mxu0 0.0
        %1288 = vmatprep.subr.mxu0 0.0
        %1289 = vmatpush1.msra.mxu0 0.0
        %1290 = vmatprep.subr.mxu0 0.0
        %1291 = vmatpush1.msra.mxu0 0.0
        %1292 = vmatprep.mubr.f32.mxu0 0.0
        %1293 = vmatmul.mubr.f32.gmra.mrb[0].mxu0 %v1223
        %v1294 = vpop.f32.mrb[0].mxu0
        %v1295 = vadd.f32 0.0, %v1294
        %v1296 = vpop.f32.mrb[0].mxu0
        %1297 = vmatprep.mubr.f32.mxu0 0.0
        %1298 = vmatmul.mubr.f32.gmra.mrb[0].mxu0 %v1226
        %v1299 = vpop.f32.mrb[0].mxu0
        %v1300 = vadd.f32 0.0, %v1299
        %v1301 = vpop.f32.mrb[0].mxu0
        %1302 = vdwg.mxu0
        %1303 = vrot.lane.b32.xlu0 %v297, 88
        %v1304 = vpop.permute.xlu0 %1303
        %1305 = vrot.lane.b32.xlu0 %v303, 88
        %v1306 = vpop.permute.xlu0 %1305
        %1307 = vrot.lane.b32.xlu0 %v297, 24
        %v1308 = vpop.permute.xlu0 %1307
        %1309 = vrot.lane.b32.xlu0 %v303, 24
        %v1310 = vpop.permute.xlu0 %1309
        %v1311 = vsel %vm313, %v1304, 0
        %v1313 = vsel %vm313, %v1306, 0
        %v1315 = vsel %vm313, %v1308, 0
        %v1317 = vsel %vm313, %v1310, 0
        %1319 = vmatprep.subr.mxu0 0.0
        %1320 = vmatpush1.xpose.msra.mxu0 %v1315
        %1321 = vmatprep.subr.mxu0 0.0
        %1322 = vmatpush1.xpose.msra.mxu0 %v1317
        %1323 = vmatprep.subr.mxu0 0.0
        %1324 = vmatpush1.xpose.msra.mxu0 0.0
        %1325 = vmatprep.subr.mxu0 0.0
        %1326 = vmatpush1.xpose.msra.mxu0 0.0
        %1327 = vmatprep.subr.mxu0 0.0
        %1328 = vmatpush1.xpose.msra.mxu0 0.0
        %1329 = vmatprep.subr.mxu0 0.0
        %1330 = vmatpush1.xpose.msra.mxu0 0.0
        %1331 = vmatprep.subr.mxu0 0.0
        %1332 = vmatpush1.xpose.msra.mxu0 0.0
        %1333 = vmatprep.subr.mxu0 0.0
        %1334 = vmatpush1.xpose.msra.mxu0 0.0
        %1335 = vmatprep.subr.mxu0 0.0
        %1336 = vmatpush1.xpose.msra.mxu0 0.0
        %1337 = vmatprep.subr.mxu0 0.0
        %1338 = vmatpush1.xpose.msra.mxu0 0.0
        %1339 = vmatprep.subr.mxu0 0.0
        %1340 = vmatpush1.xpose.msra.mxu0 0.0
        %1341 = vmatprep.subr.mxu0 0.0
        %1342 = vmatpush1.xpose.msra.mxu0 0.0
        %1343 = vmatprep.subr.mxu0 0.0
        %1344 = vmatpush1.xpose.msra.mxu0 0.0
        %1345 = vmatprep.subr.mxu0 0.0
        %1346 = vmatpush1.xpose.msra.mxu0 0.0
        %1347 = vmatprep.subr.mxu0 0.0
        %1348 = vmatpush1.xpose.msra.mxu0 0.0
        %1349 = vmatprep.subr.mxu0 0.0
        %1350 = vmatpush1.xpose.msra.mxu0 0.0
        %1351 = vmatprep.subr.mxu0 0.0
        %1352 = vmatpush1.xpose.msra.mxu0 0.0
        %1353 = vmatprep.subr.mxu0 0.0
        %1354 = vmatpush1.xpose.msra.mxu0 0.0
        %1355 = vmatprep.subr.mxu0 0.0
        %1356 = vmatpush1.xpose.msra.mxu0 0.0
        %1357 = vmatprep.subr.mxu0 0.0
        %1358 = vmatpush1.xpose.msra.mxu0 0.0
        %1359 = vmatprep.subr.mxu0 0.0
        %1360 = vmatpush1.xpose.msra.mxu0 0.0
        %1361 = vmatprep.subr.mxu0 0.0
        %1362 = vmatpush1.xpose.msra.mxu0 0.0
        %1363 = vmatprep.subr.mxu0 0.0
        %1364 = vmatpush1.xpose.msra.mxu0 0.0
        %1365 = vmatprep.subr.mxu0 0.0
        %1366 = vmatpush1.xpose.msra.mxu0 0.0
        %1367 = vmatprep.subr.mxu0 0.0
        %1368 = vmatpush1.xpose.msra.mxu0 0.0
        %1369 = vmatprep.subr.mxu0 0.0
        %1370 = vmatpush1.xpose.msra.mxu0 0.0
        %1371 = vmatprep.subr.mxu0 0.0
        %1372 = vmatpush1.xpose.msra.mxu0 0.0
        %1373 = vmatprep.subr.mxu0 0.0
        %1374 = vmatpush1.xpose.msra.mxu0 0.0
        %1375 = vmatprep.subr.mxu0 0.0
        %1376 = vmatpush1.xpose.msra.mxu0 0.0
        %1377 = vmatprep.subr.mxu0 0.0
        %1378 = vmatpush1.xpose.msra.mxu0 0.0
        %1379 = vmatprep.subr.mxu0 0.0
        %1380 = vmatpush1.xpose.msra.mxu0 0.0
        %1381 = vmatprep.subr.mxu0 0.0
        %1382 = vmatpush1.xpose.msra.mxu0 0.0
        %1383 = vmatprep.mubr.f32.mxu0 0.0
        %1384 = vmatmul.mubr.f32.gmra.mrb[0].mxu0 %v1311
        %v1385 = vpop.f32.mrb[0].mxu0
        %v1386 = vadd.f32 0.0, %v1385
        %v1387 = vpop.f32.mrb[0].mxu0
        %1388 = vmatprep.mubr.f32.mxu0 0.0
        %1389 = vmatmul.mubr.f32.gmra.mrb[0].mxu0 %v1313
        %v1390 = vpop.f32.mrb[0].mxu0
        %v1391 = vadd.f32 0.0, %v1390
        %v1392 = vpop.f32.mrb[0].mxu0
        %1393 = vdwg.mxu0
        %v1394 = vsel %vm397, %v1386, -inf
        %1395 = vmax.xlane.f32.xlu0 %v1394
        %v1396 = vpop.xlane.xlu0 %1395
        %v1397 = vsel %vm397, %v1391, -inf
        %1398 = vmax.xlane.f32.xlu0 %v1397
        %v1399 = vpop.xlane.xlu0 %1398
        %v1400 = vsub.f32 %v1386, %v1396
        %v1401 = vsub.f32 %v1391, %v1399
        %v1402 = vmul.f32 %v1400, 1.442695
        %v1403 = vpow.pop %v1402
        %v1404 = vmul.f32 %v1401, 1.442695
        %v1405 = vpow.pop %v1404
        %v1406 = vsel %vm397, %v1403, 0.0
        %1407 = vadd.xlane.f32.xlu0 %v1406
        %v1408 = vpop.xlane.xlu0 %1407
        %v1409 = vsel %vm397, %v1405, 0.0
        %1410 = vadd.xlane.f32.xlu0 %v1409
        %v1411 = vpop.xlane.xlu0 %1410
        %v1412 = vrcp.pop %v1408
        %v1413 = vrcp.pop %v1411
        %v1414 = vmul.f32 %v1403, %v1412
        %v1415 = vmul.f32 %v1405, %v1413
        %1416 = vrot.lane.b32.xlu0 %v299, 88
        %v1417 = vpop.permute.xlu0 %1416
        %1418 = vrot.lane.b32.xlu0 %v305, 88
        %v1419 = vpop.permute.xlu0 %1418
        %v1423 = vsel %vm397, %v1414, 0
        %v1426 = vsel %vm397, %v1415, 0
        %1428 = vmatprep.subr.mxu0 0.0
        %1429 = vmatpush1.msra.mxu0 %v1417
        %1430 = vmatprep.subr.mxu0 0.0
        %1431 = vmatpush1.msra.mxu0 %v1419
        %1432 = vmatprep.subr.mxu0 0.0
        %1433 = vmatpush1.msra.mxu0 0.0
        %1434 = vmatprep.subr.mxu0 0.0
        %1435 = vmatpush1.msra.mxu0 0.0
        %1436 = vmatprep.subr.mxu0 0.0
        %1437 = vmatpush1.msra.mxu0 0.0
        %1438 = vmatprep.subr.mxu0 0.0
        %1439 = vmatpush1.msra.mxu0 0.0
        %1440 = vmatprep.subr.mxu0 0.0
        %1441 = vmatpush1.msra.mxu0 0.0
        %1442 = vmatprep.subr.mxu0 0.0
        %1443 = vmatpush1.msra.mxu0 0.0
        %1444 = vmatprep.subr.mxu0 0.0
        %1445 = vmatpush1.msra.mxu0 0.0
        %1446 = vmatprep.subr.mxu0 0.0
        %1447 = vmatpush1.msra.mxu0 0.0
        %1448 = vmatprep.subr.mxu0 0.0
        %1449 = vmatpush1.msra.mxu0 0.0
        %1450 = vmatprep.subr.mxu0 0.0
        %1451 = vmatpush1.msra.mxu0 0.0
        %1452 = vmatprep.subr.mxu0 0.0
        %1453 = vmatpush1.msra.mxu0 0.0
        %1454 = vmatprep.subr.mxu0 0.0
        %1455 = vmatpush1.msra.mxu0 0.0
        %1456 = vmatprep.subr.mxu0 0.0
        %1457 = vmatpush1.msra.mxu0 0.0
        %1458 = vmatprep.subr.mxu0 0.0
        %1459 = vmatpush1.msra.mxu0 0.0
        %1460 = vmatprep.subr.mxu0 0.0
        %1461 = vmatpush1.msra.mxu0 0.0
        %1462 = vmatprep.subr.mxu0 0.0
        %1463 = vmatpush1.msra.mxu0 0.0
        %1464 = vmatprep.subr.mxu0 0.0
        %1465 = vmatpush1.msra.mxu0 0.0
        %1466 = vmatprep.subr.mxu0 0.0
        %1467 = vmatpush1.msra.mxu0 0.0
        %1468 = vmatprep.subr.mxu0 0.0
        %1469 = vmatpush1.msra.mxu0 0.0
        %1470 = vmatprep.subr.mxu0 0.0
        %1471 = vmatpush1.msra.mxu0 0.0
        %1472 = vmatprep.subr.mxu0 0.0
        %1473 = vmatpush1.msra.mxu0 0.0
        %1474 = vmatprep.subr.mxu0 0.0
        %1475 = vmatpush1.msra.mxu0 0.0
        %1476 = vmatprep.subr.mxu0 0.0
        %1477 = vmatpush1.msra.mxu0 0.0
        %1478 = vmatprep.subr.mxu0 0.0
        %1479 = vmatpush1.msra.mxu0 0.0
        %1480 = vmatprep.subr.mxu0 0.0
        %1481 = vmatpush1.msra.mxu0 0.0
        %1482 = vmatprep.subr.mxu0 0.0
        %1483 = vmatpush1.msra.mxu0 0.0
        %1484 = vmatprep.subr.mxu0 0.0
        %1485 = vmatpush1.msra.mxu0 0.0
        %1486 = vmatprep.subr.mxu0 0.0
        %1487 = vmatpush1.msra.mxu0 0.0
        %1488 = vmatprep.subr.mxu0 0.0
        %1489 = vmatpush1.msra.mxu0 0.0
        %1490 = vmatprep.subr.mxu0 0.0
        %1491 = vmatpush1.msra.mxu0 0.0
        %1492 = vmatprep.mubr.f32.mxu0 0.0
        %1493 = vmatmul.mubr.f32.gmra.mrb[0].mxu0 %v1423
        %v1494 = vpop.f32.mrb[0].mxu0
        %v1495 = vadd.f32 0.0, %v1494
        %v1496 = vpop.f32.mrb[0].mxu0
        %1497 = vmatprep.mubr.f32.mxu0 0.0
        %1498 = vmatmul.mubr.f32.gmra.mrb[0].mxu0 %v1426
        %v1499 = vpop.f32.mrb[0].mxu0
        %v1500 = vadd.f32 0.0, %v1499
        %v1501 = vpop.f32.mrb[0].mxu0
        %1502 = vdwg.mxu0
        %1503 = vrot.lane.b32.xlu0 %v297, 80
        %v1504 = vpop.permute.xlu0 %1503
        %1505 = vrot.lane.b32.xlu0 %v303, 80
        %v1506 = vpop.permute.xlu0 %1505
        %1507 = vrot.lane.b32.xlu0 %v297, 16
        %v1508 = vpop.permute.xlu0 %1507
        %1509 = vrot.lane.b32.xlu0 %v303, 16
        %v1510 = vpop.permute.xlu0 %1509
        %v1511 = vsel %vm313, %v1504, 0
        %v1513 = vsel %vm313, %v1506, 0
        %v1515 = vsel %vm313, %v1508, 0
        %v1517 = vsel %vm313, %v1510, 0
        %1519 = vmatprep.subr.mxu0 0.0
        %1520 = vmatpush1.xpose.msra.mxu0 %v1515
        %1521 = vmatprep.subr.mxu0 0.0
        %1522 = vmatpush1.xpose.msra.mxu0 %v1517
        %1523 = vmatprep.subr.mxu0 0.0
        %1524 = vmatpush1.xpose.msra.mxu0 0.0
        %1525 = vmatprep.subr.mxu0 0.0
        %1526 = vmatpush1.xpose.msra.mxu0 0.0
        %1527 = vmatprep.subr.mxu0 0.0
        %1528 = vmatpush1.xpose.msra.mxu0 0.0
        %1529 = vmatprep.subr.mxu0 0.0
        %1530 = vmatpush1.xpose.msra.mxu0 0.0
        %1531 = vmatprep.subr.mxu0 0.0
        %1532 = vmatpush1.xpose.msra.mxu0 0.0
        %1533 = vmatprep.subr.mxu0 0.0
        %1534 = vmatpush1.xpose.msra.mxu0 0.0
        %1535 = vmatprep.subr.mxu0 0.0
        %1536 = vmatpush1.xpose.msra.mxu0 0.0
        %1537 = vmatprep.subr.mxu0 0.0
        %1538 = vmatpush1.xpose.msra.mxu0 0.0
        %1539 = vmatprep.subr.mxu0 0.0
        %1540 = vmatpush1.xpose.msra.mxu0 0.0
        %1541 = vmatprep.subr.mxu0 0.0
        %1542 = vmatpush1.xpose.msra.mxu0 0.0
        %1543 = vmatprep.subr.mxu0 0.0
        %1544 = vmatpush1.xpose.msra.mxu0 0.0
        %1545 = vmatprep.subr.mxu0 0.0
        %1546 = vmatpush1.xpose.msra.mxu0 0.0
        %1547 = vmatprep.subr.mxu0 0.0
        %1548 = vmatpush1.xpose.msra.mxu0 0.0
        %1549 = vmatprep.subr.mxu0 0.0
        %1550 = vmatpush1.xpose.msra.mxu0 0.0
        %1551 = vmatprep.subr.mxu0 0.0
        %1552 = vmatpush1.xpose.msra.mxu0 0.0
        %1553 = vmatprep.subr.mxu0 0.0
        %1554 = vmatpush1.xpose.msra.mxu0 0.0
        %1555 = vmatprep.subr.mxu0 0.0
        %1556 = vmatpush1.xpose.msra.mxu0 0.0
        %1557 = vmatprep.subr.mxu0 0.0
        %1558 = vmatpush1.xpose.msra.mxu0 0.0
        %1559 = vmatprep.subr.mxu0 0.0
        %1560 = vmatpush1.xpose.msra.mxu0 0.0
        %1561 = vmatprep.subr.mxu0 0.0
        %1562 = vmatpush1.xpose.msra.mxu0 0.0
        %1563 = vmatprep.subr.mxu0 0.0
        %1564 = vmatpush1.xpose.msra.mxu0 0.0
        %1565 = vmatprep.subr.mxu0 0.0
        %1566 = vmatpush1.xpose.msra.mxu0 0.0
        %1567 = vmatprep.subr.mxu0 0.0
        %1568 = vmatpush1.xpose.msra.mxu0 0.0
        %1569 = vmatprep.subr.mxu0 0.0
        %1570 = vmatpush1.xpose.msra.mxu0 0.0
        %1571 = vmatprep.subr.mxu0 0.0
        %1572 = vmatpush1.xpose.msra.mxu0 0.0
        %1573 = vmatprep.subr.mxu0 0.0
        %1574 = vmatpush1.xpose.msra.mxu0 0.0
        %1575 = vmatprep.subr.mxu0 0.0
        %1576 = vmatpush1.xpose.msra.mxu0 0.0
        %1577 = vmatprep.subr.mxu0 0.0
        %1578 = vmatpush1.xpose.msra.mxu0 0.0
        %1579 = vmatprep.subr.mxu0 0.0
        %1580 = vmatpush1.xpose.msra.mxu0 0.0
        %1581 = vmatprep.subr.mxu0 0.0
        %1582 = vmatpush1.xpose.msra.mxu0 0.0
        %1583 = vmatprep.mubr.f32.mxu0 0.0
        %1584 = vmatmul.mubr.f32.gmra.mrb[0].mxu0 %v1511
        %v1585 = vpop.f32.mrb[0].mxu0
        %v1586 = vadd.f32 0.0, %v1585
        %v1587 = vpop.f32.mrb[0].mxu0
        %1588 = vmatprep.mubr.f32.mxu0 0.0
        %1589 = vmatmul.mubr.f32.gmra.mrb[0].mxu0 %v1513
        %v1590 = vpop.f32.mrb[0].mxu0
        %v1591 = vadd.f32 0.0, %v1590
        %v1592 = vpop.f32.mrb[0].mxu0
        %1593 = vdwg.mxu0
        %v1594 = vsel %vm397, %v1586, -inf
        %1595 = vmax.xlane.f32.xlu0 %v1594
        %v1596 = vpop.xlane.xlu0 %1595
        %v1597 = vsel %vm397, %v1591, -inf
        %1598 = vmax.xlane.f32.xlu0 %v1597
        %v1599 = vpop.xlane.xlu0 %1598
        %v1600 = vsub.f32 %v1586, %v1596
        %v1601 = vsub.f32 %v1591, %v1599
        %v1602 = vmul.f32 %v1600, 1.442695
        %v1603 = vpow.pop %v1602
        %v1604 = vmul.f32 %v1601, 1.442695
        %v1605 = vpow.pop %v1604
        %v1606 = vsel %vm397, %v1603, 0.0
        %1607 = vadd.xlane.f32.xlu0 %v1606
        %v1608 = vpop.xlane.xlu0 %1607
        %v1609 = vsel %vm397, %v1605, 0.0
        %1610 = vadd.xlane.f32.xlu0 %v1609
        %v1611 = vpop.xlane.xlu0 %1610
        %v1612 = vrcp.pop %v1608
        %v1613 = vrcp.pop %v1611
        %v1614 = vmul.f32 %v1603, %v1612
        %v1615 = vmul.f32 %v1605, %v1613
        %1616 = vrot.lane.b32.xlu0 %v299, 80
        %v1617 = vpop.permute.xlu0 %1616
        %1618 = vrot.lane.b32.xlu0 %v305, 80
        %v1619 = vpop.permute.xlu0 %1618
        %v1623 = vsel %vm397, %v1614, 0
        %v1626 = vsel %vm397, %v1615, 0
        %1628 = vmatprep.subr.mxu0 0.0
        %1629 = vmatpush1.msra.mxu0 %v1617
        %1630 = vmatprep.subr.mxu0 0.0
        %1631 = vmatpush1.msra.mxu0 %v1619
        %1632 = vmatprep.subr.mxu0 0.0
        %1633 = vmatpush1.msra.mxu0 0.0
        %1634 = vmatprep.subr.mxu0 0.0
        %1635 = vmatpush1.msra.mxu0 0.0
        %1636 = vmatprep.subr.mxu0 0.0
        %1637 = vmatpush1.msra.mxu0 0.0
        %1638 = vmatprep.subr.mxu0 0.0
        %1639 = vmatpush1.msra.mxu0 0.0
        %1640 = vmatprep.subr.mxu0 0.0
        %1641 = vmatpush1.msra.mxu0 0.0
        %1642 = vmatprep.subr.mxu0 0.0
        %1643 = vmatpush1.msra.mxu0 0.0
        %1644 = vmatprep.subr.mxu0 0.0
        %1645 = vmatpush1.msra.mxu0 0.0
        %1646 = vmatprep.subr.mxu0 0.0
        %1647 = vmatpush1.msra.mxu0 0.0
        %1648 = vmatprep.subr.mxu0 0.0
        %1649 = vmatpush1.msra.mxu0 0.0
        %1650 = vmatprep.subr.mxu0 0.0
        %1651 = vmatpush1.msra.mxu0 0.0
        %1652 = vmatprep.subr.mxu0 0.0
        %1653 = vmatpush1.msra.mxu0 0.0
        %1654 = vmatprep.subr.mxu0 0.0
        %1655 = vmatpush1.msra.mxu0 0.0
        %1656 = vmatprep.subr.mxu0 0.0
        %1657 = vmatpush1.msra.mxu0 0.0
        %1658 = vmatprep.subr.mxu0 0.0
        %1659 = vmatpush1.msra.mxu0 0.0
        %1660 = vmatprep.subr.mxu0 0.0
        %1661 = vmatpush1.msra.mxu0 0.0
        %1662 = vmatprep.subr.mxu0 0.0
        %1663 = vmatpush1.msra.mxu0 0.0
        %1664 = vmatprep.subr.mxu0 0.0
        %1665 = vmatpush1.msra.mxu0 0.0
        %1666 = vmatprep.subr.mxu0 0.0
        %1667 = vmatpush1.msra.mxu0 0.0
        %1668 = vmatprep.subr.mxu0 0.0
        %1669 = vmatpush1.msra.mxu0 0.0
        %1670 = vmatprep.subr.mxu0 0.0
        %1671 = vmatpush1.msra.mxu0 0.0
        %1672 = vmatprep.subr.mxu0 0.0
        %1673 = vmatpush1.msra.mxu0 0.0
        %1674 = vmatprep.subr.mxu0 0.0
        %1675 = vmatpush1.msra.mxu0 0.0
        %1676 = vmatprep.subr.mxu0 0.0
        %1677 = vmatpush1.msra.mxu0 0.0
        %1678 = vmatprep.subr.mxu0 0.0
        %1679 = vmatpush1.msra.mxu0 0.0
        %1680 = vmatprep.subr.mxu0 0.0
        %1681 = vmatpush1.msra.mxu0 0.0
        %1682 = vmatprep.subr.mxu0 0.0
        %1683 = vmatpush1.msra.mxu0 0.0
        %1684 = vmatprep.subr.mxu0 0.0
        %1685 = vmatpush1.msra.mxu0 0.0
        %1686 = vmatprep.subr.mxu0 0.0
        %1687 = vmatpush1.msra.mxu0 0.0
        %1688 = vmatprep.subr.mxu0 0.0
        %1689 = vmatpush1.msra.mxu0 0.0
        %1690 = vmatprep.subr.mxu0 0.0
        %1691 = vmatpush1.msra.mxu0 0.0
        %1692 = vmatprep.mubr.f32.mxu0 0.0
        %1693 = vmatmul.mubr.f32.gmra.mrb[0].mxu0 %v1623
        %v1694 = vpop.f32.mrb[0].mxu0
        %v1695 = vadd.f32 0.0, %v1694
        %v1696 = vpop.f32.mrb[0].mxu0
        %1697 = vmatprep.mubr.f32.mxu0 0.0
        %1698 = vmatmul.mubr.f32.gmra.mrb[0].mxu0 %v1626
        %v1699 = vpop.f32.mrb[0].mxu0
        %v1700 = vadd.f32 0.0, %v1699
        %v1701 = vpop.f32.mrb[0].mxu0
        %1702 = vdwg.mxu0
        %1703 = vrot.lane.b32.xlu0 %v297, 72
        %v1704 = vpop.permute.xlu0 %1703
        %1705 = vrot.lane.b32.xlu0 %v303, 72
        %v1706 = vpop.permute.xlu0 %1705
        %1707 = vrot.lane.b32.xlu0 %v297, 8
        %v1708 = vpop.permute.xlu0 %1707
        %1709 = vrot.lane.b32.xlu0 %v303, 8
        %v1710 = vpop.permute.xlu0 %1709
        %v1711 = vsel %vm313, %v1704, 0
        %v1713 = vsel %vm313, %v1706, 0
        %v1715 = vsel %vm313, %v1708, 0
        %v1717 = vsel %vm313, %v1710, 0
        %1719 = vmatprep.subr.mxu0 0.0
        %1720 = vmatpush1.xpose.msra.mxu0 %v1715
        %1721 = vmatprep.subr.mxu0 0.0
        %1722 = vmatpush1.xpose.msra.mxu0 %v1717
        %1723 = vmatprep.subr.mxu0 0.0
        %1724 = vmatpush1.xpose.msra.mxu0 0.0
        %1725 = vmatprep.subr.mxu0 0.0
        %1726 = vmatpush1.xpose.msra.mxu0 0.0
        %1727 = vmatprep.subr.mxu0 0.0
        %1728 = vmatpush1.xpose.msra.mxu0 0.0
        %1729 = vmatprep.subr.mxu0 0.0
        %1730 = vmatpush1.xpose.msra.mxu0 0.0
        %1731 = vmatprep.subr.mxu0 0.0
        %1732 = vmatpush1.xpose.msra.mxu0 0.0
        %1733 = vmatprep.subr.mxu0 0.0
        %1734 = vmatpush1.xpose.msra.mxu0 0.0
        %1735 = vmatprep.subr.mxu0 0.0
        %1736 = vmatpush1.xpose.msra.mxu0 0.0
        %1737 = vmatprep.subr.mxu0 0.0
        %1738 = vmatpush1.xpose.msra.mxu0 0.0
        %1739 = vmatprep.subr.mxu0 0.0
        %1740 = vmatpush1.xpose.msra.mxu0 0.0
        %1741 = vmatprep.subr.mxu0 0.0
        %1742 = vmatpush1.xpose.msra.mxu0 0.0
        %1743 = vmatprep.subr.mxu0 0.0
        %1744 = vmatpush1.xpose.msra.mxu0 0.0
        %1745 = vmatprep.subr.mxu0 0.0
        %1746 = vmatpush1.xpose.msra.mxu0 0.0
        %1747 = vmatprep.subr.mxu0 0.0
        %1748 = vmatpush1.xpose.msra.mxu0 0.0
        %1749 = vmatprep.subr.mxu0 0.0
        %1750 = vmatpush1.xpose.msra.mxu0 0.0
        %1751 = vmatprep.subr.mxu0 0.0
        %1752 = vmatpush1.xpose.msra.mxu0 0.0
        %1753 = vmatprep.subr.mxu0 0.0
        %1754 = vmatpush1.xpose.msra.mxu0 0.0
        %1755 = vmatprep.subr.mxu0 0.0
        %1756 = vmatpush1.xpose.msra.mxu0 0.0
        %1757 = vmatprep.subr.mxu0 0.0
        %1758 = vmatpush1.xpose.msra.mxu0 0.0
        %1759 = vmatprep.subr.mxu0 0.0
        %1760 = vmatpush1.xpose.msra.mxu0 0.0
        %1761 = vmatprep.subr.mxu0 0.0
        %1762 = vmatpush1.xpose.msra.mxu0 0.0
        %1763 = vmatprep.subr.mxu0 0.0
        %1764 = vmatpush1.xpose.msra.mxu0 0.0
        %1765 = vmatprep.subr.mxu0 0.0
        %1766 = vmatpush1.xpose.msra.mxu0 0.0
        %1767 = vmatprep.subr.mxu0 0.0
        %1768 = vmatpush1.xpose.msra.mxu0 0.0
        %1769 = vmatprep.subr.mxu0 0.0
        %1770 = vmatpush1.xpose.msra.mxu0 0.0
        %1771 = vmatprep.subr.mxu0 0.0
        %1772 = vmatpush1.xpose.msra.mxu0 0.0
        %1773 = vmatprep.subr.mxu0 0.0
        %1774 = vmatpush1.xpose.msra.mxu0 0.0
        %1775 = vmatprep.subr.mxu0 0.0
        %1776 = vmatpush1.xpose.msra.mxu0 0.0
        %1777 = vmatprep.subr.mxu0 0.0
        %1778 = vmatpush1.xpose.msra.mxu0 0.0
        %1779 = vmatprep.subr.mxu0 0.0
        %1780 = vmatpush1.xpose.msra.mxu0 0.0
        %1781 = vmatprep.subr.mxu0 0.0
        %1782 = vmatpush1.xpose.msra.mxu0 0.0
        %1783 = vmatprep.mubr.f32.mxu0 0.0
        %1784 = vmatmul.mubr.f32.gmra.mrb[0].mxu0 %v1711
        %v1785 = vpop.f32.mrb[0].mxu0
        %v1786 = vadd.f32 0.0, %v1785
        %v1787 = vpop.f32.mrb[0].mxu0
        %1788 = vmatprep.mubr.f32.mxu0 0.0
        %1789 = vmatmul.mubr.f32.gmra.mrb[0].mxu0 %v1713
        %v1790 = vpop.f32.mrb[0].mxu0
        %v1791 = vadd.f32 0.0, %v1790
        %v1792 = vpop.f32.mrb[0].mxu0
        %1793 = vdwg.mxu0
        %v1794 = vsel %vm397, %v1786, -inf
        %1795 = vmax.xlane.f32.xlu0 %v1794
        %v1796 = vpop.xlane.xlu0 %1795
        %v1797 = vsel %vm397, %v1791, -inf
        %1798 = vmax.xlane.f32.xlu0 %v1797
        %v1799 = vpop.xlane.xlu0 %1798
        %v1800 = vsub.f32 %v1786, %v1796
        %v1801 = vsub.f32 %v1791, %v1799
        %v1802 = vmul.f32 %v1800, 1.442695
        %v1803 = vpow.pop %v1802
        %v1804 = vmul.f32 %v1801, 1.442695
        %v1805 = vpow.pop %v1804
        %v1806 = vsel %vm397, %v1803, 0.0
        %1807 = vadd.xlane.f32.xlu0 %v1806
        %v1808 = vpop.xlane.xlu0 %1807
        %v1809 = vsel %vm397, %v1805, 0.0
        %1810 = vadd.xlane.f32.xlu0 %v1809
        %v1811 = vpop.xlane.xlu0 %1810
        %v1812 = vrcp.pop %v1808
        %v1813 = vrcp.pop %v1811
        %v1814 = vmul.f32 %v1803, %v1812
        %v1815 = vmul.f32 %v1805, %v1813
        %1816 = vrot.lane.b32.xlu0 %v299, 72
        %v1817 = vpop.permute.xlu0 %1816
        %1818 = vrot.lane.b32.xlu0 %v305, 72
        %v1819 = vpop.permute.xlu0 %1818
        %v1823 = vsel %vm397, %v1814, 0
        %v1826 = vsel %vm397, %v1815, 0
        %1828 = vmatprep.subr.mxu0 0.0
        %1829 = vmatpush1.msra.mxu0 %v1817
        %1830 = vmatprep.subr.mxu0 0.0
        %1831 = vmatpush1.msra.mxu0 %v1819
        %1832 = vmatprep.subr.mxu0 0.0
        %1833 = vmatpush1.msra.mxu0 0.0
        %1834 = vmatprep.subr.mxu0 0.0
        %1835 = vmatpush1.msra.mxu0 0.0
        %1836 = vmatprep.subr.mxu0 0.0
        %1837 = vmatpush1.msra.mxu0 0.0
        %1838 = vmatprep.subr.mxu0 0.0
        %1839 = vmatpush1.msra.mxu0 0.0
        %1840 = vmatprep.subr.mxu0 0.0
        %1841 = vmatpush1.msra.mxu0 0.0
        %1842 = vmatprep.subr.mxu0 0.0
        %1843 = vmatpush1.msra.mxu0 0.0
        %1844 = vmatprep.subr.mxu0 0.0
        %1845 = vmatpush1.msra.mxu0 0.0
        %1846 = vmatprep.subr.mxu0 0.0
        %1847 = vmatpush1.msra.mxu0 0.0
        %1848 = vmatprep.subr.mxu0 0.0
        %1849 = vmatpush1.msra.mxu0 0.0
        %1850 = vmatprep.subr.mxu0 0.0
        %1851 = vmatpush1.msra.mxu0 0.0
        %1852 = vmatprep.subr.mxu0 0.0
        %1853 = vmatpush1.msra.mxu0 0.0
        %1854 = vmatprep.subr.mxu0 0.0
        %1855 = vmatpush1.msra.mxu0 0.0
        %1856 = vmatprep.subr.mxu0 0.0
        %1857 = vmatpush1.msra.mxu0 0.0
        %1858 = vmatprep.subr.mxu0 0.0
        %1859 = vmatpush1.msra.mxu0 0.0
        %1860 = vmatprep.subr.mxu0 0.0
        %1861 = vmatpush1.msra.mxu0 0.0
        %1862 = vmatprep.subr.mxu0 0.0
        %1863 = vmatpush1.msra.mxu0 0.0
        %1864 = vmatprep.subr.mxu0 0.0
        %1865 = vmatpush1.msra.mxu0 0.0
        %1866 = vmatprep.subr.mxu0 0.0
        %1867 = vmatpush1.msra.mxu0 0.0
        %1868 = vmatprep.subr.mxu0 0.0
        %1869 = vmatpush1.msra.mxu0 0.0
        %1870 = vmatprep.subr.mxu0 0.0
        %1871 = vmatpush1.msra.mxu0 0.0
        %1872 = vmatprep.subr.mxu0 0.0
        %1873 = vmatpush1.msra.mxu0 0.0
        %1874 = vmatprep.subr.mxu0 0.0
        %1875 = vmatpush1.msra.mxu0 0.0
        %1876 = vmatprep.subr.mxu0 0.0
        %1877 = vmatpush1.msra.mxu0 0.0
        %1878 = vmatprep.subr.mxu0 0.0
        %1879 = vmatpush1.msra.mxu0 0.0
        %1880 = vmatprep.subr.mxu0 0.0
        %1881 = vmatpush1.msra.mxu0 0.0
        %1882 = vmatprep.subr.mxu0 0.0
        %1883 = vmatpush1.msra.mxu0 0.0
        %1884 = vmatprep.subr.mxu0 0.0
        %1885 = vmatpush1.msra.mxu0 0.0
        %1886 = vmatprep.subr.mxu0 0.0
        %1887 = vmatpush1.msra.mxu0 0.0
        %1888 = vmatprep.subr.mxu0 0.0
        %1889 = vmatpush1.msra.mxu0 0.0
        %1890 = vmatprep.subr.mxu0 0.0
        %1891 = vmatpush1.msra.mxu0 0.0
        %1892 = vmatprep.mubr.f32.mxu0 0.0
        %1893 = vmatmul.mubr.f32.gmra.mrb[0].mxu0 %v1823
        %v1894 = vpop.f32.mrb[0].mxu0
        %v1895 = vadd.f32 0.0, %v1894
        %v1896 = vpop.f32.mrb[0].mxu0
        %1897 = vmatprep.mubr.f32.mxu0 0.0
        %1898 = vmatmul.mubr.f32.gmra.mrb[0].mxu0 %v1826
        %v1899 = vpop.f32.mrb[0].mxu0
        %v1900 = vadd.f32 0.0, %v1899
        %v1901 = vpop.f32.mrb[0].mxu0
        %1902 = vdwg.mxu0
        %1905 = vrot.lane.b32.xlu0 %v695, 8
        %v1906 = vpop.permute.xlu0 %1905
        %1907 = vrot.lane.b32.xlu0 %v700, 8
        %v1908 = vpop.permute.xlu0 %1907
        %1913 = vrot.lane.b32.xlu0 %v895, 16
        %v1914 = vpop.permute.xlu0 %1913
        %1915 = vrot.lane.b32.xlu0 %v900, 16
        %v1916 = vpop.permute.xlu0 %1915
        %1921 = vrot.lane.b32.xlu0 %v1095, 24
        %v1922 = vpop.permute.xlu0 %1921
        %1923 = vrot.lane.b32.xlu0 %v1100, 24
        %v1924 = vpop.permute.xlu0 %1923
        %1929 = vrot.lane.b32.xlu0 %v1295, 32
        %v1930 = vpop.permute.xlu0 %1929
        %1931 = vrot.lane.b32.xlu0 %v1300, 32
        %v1932 = vpop.permute.xlu0 %1931
        %1937 = vrot.lane.b32.xlu0 %v1495, 40
        %v1938 = vpop.permute.xlu0 %1937
        %1939 = vrot.lane.b32.xlu0 %v1500, 40
        %v1940 = vpop.permute.xlu0 %1939
        %1945 = vrot.lane.b32.xlu0 %v1695, 48
        %v1946 = vpop.permute.xlu0 %1945
        %1947 = vrot.lane.b32.xlu0 %v1700, 48
        %v1948 = vpop.permute.xlu0 %1947
        %1953 = vrot.lane.b32.xlu0 %v1895, 56
        %v1954 = vpop.permute.xlu0 %1953
        %1955 = vrot.lane.b32.xlu0 %v1900, 56
        %v1956 = vpop.permute.xlu0 %1955
        %v1959 = vsel %vm313, %v493, %v1906
        %v1960 = vsel %vm313, %v498, %v1908
        %v1961 = vsel %vm397, %v1959, %v1914
        %v1962 = vsel %vm397, %v1960, %v1916
        %vm1963 = vcmask 195584
        %v1964 = vsel %vm1963, %v1961, %v1922
        %v1965 = vsel %vm1963, %v1962, %v1924
        %vm1966 = vcmask 261120
        %v1967 = vsel %vm1966, %v1964, %v1930
        %v1968 = vsel %vm1966, %v1965, %v1932
        %vm1969 = vcmask 326656
        %v1970 = vsel %vm1969, %v1967, %v1938
        %v1971 = vsel %vm1969, %v1968, %v1940
        %vm1972 = vcmask 392192
        %v1973 = vsel %vm1972, %v1970, %v1946
        %v1974 = vsel %vm1972, %v1971, %v1948
        %vm1975 = vcmask 457728
        %v1976 = vsel %vm1975, %v1973, %v1954
        %v1977 = vsel %vm1975, %v1974, %v1956
        %v1978 = vld [vmem:[%s2] sm:$0xff]
        %v1979 = vld [vmem:[%s2 + $0x8] sm:$0xff]
        %v1980 = vld [vmem:[%s2 + $0x10] sm:$0xff]
        %v1981 = vld [vmem:[%s2 + $0x18] sm:$0xff]
        %v1982 = vld [vmem:[%s2 + $0x20] sm:$0xff]
        %v1983 = vld [vmem:[%s2 + $0x28] sm:$0xff]
        %v1984 = vld [vmem:[%s2 + $0x30] sm:$0xff]
        %v1985 = vld [vmem:[%s2 + $0x38] sm:$0xff]
        %v1986 = vld [vmem:[%s3] sm:$0x1]
        %v1988 = vlaneseq
        %v1989 = vshrl.u32 %v1988, 7
        %v1990 = vsub.s32 0, %v1989
        %v1991 = vrot.slane %v1986, %v1990
        %vm1993 = vcmask 523264
        %v1995 = vsel %vm1993, %v1976, 0
        %v1998 = vsel %vm1993, %v1977, 0
        %2000 = vmatprep.subr.mxu0 0.0
        %2001 = vmatpush1.msra.mxu0 %v1978
        %2002 = vmatprep.subr.mxu0 0.0
        %2003 = vmatpush1.msra.mxu0 %v1979
        %2004 = vmatprep.subr.mxu0 0.0
        %2005 = vmatpush1.msra.mxu0 %v1980
        %2006 = vmatprep.subr.mxu0 0.0
        %2007 = vmatpush1.msra.mxu0 %v1981
        %2008 = vmatprep.subr.mxu0 0.0
        %2009 = vmatpush1.msra.mxu0 %v1982
        %2010 = vmatprep.subr.mxu0 0.0
        %2011 = vmatpush1.msra.mxu0 %v1983
        %2012 = vmatprep.subr.mxu0 0.0
        %2013 = vmatpush1.msra.mxu0 %v1984
        %2014 = vmatprep.subr.mxu0 0.0
        %2015 = vmatpush1.msra.mxu0 %v1985
        %2016 = vmatprep.subr.mxu0 0.0
        %2017 = vmatpush1.msra.mxu0 0.0
        %2018 = vmatprep.subr.mxu0 0.0
        %2019 = vmatpush1.msra.mxu0 0.0
        %2020 = vmatprep.subr.mxu0 0.0
        %2021 = vmatpush1.msra.mxu0 0.0
        %2022 = vmatprep.subr.mxu0 0.0
        %2023 = vmatpush1.msra.mxu0 0.0
        %2024 = vmatprep.subr.mxu0 0.0
        %2025 = vmatpush1.msra.mxu0 0.0
        %2026 = vmatprep.subr.mxu0 0.0
        %2027 = vmatpush1.msra.mxu0 0.0
        %2028 = vmatprep.subr.mxu0 0.0
        %2029 = vmatpush1.msra.mxu0 0.0
        %2030 = vmatprep.subr.mxu0 0.0
        %2031 = vmatpush1.msra.mxu0 0.0
        %2032 = vmatprep.subr.mxu0 0.0
        %2033 = vmatpush1.msra.mxu0 0.0
        %2034 = vmatprep.subr.mxu0 0.0
        %2035 = vmatpush1.msra.mxu0 0.0
        %2036 = vmatprep.subr.mxu0 0.0
        %2037 = vmatpush1.msra.mxu0 0.0
        %2038 = vmatprep.subr.mxu0 0.0
        %2039 = vmatpush1.msra.mxu0 0.0
        %2040 = vmatprep.subr.mxu0 0.0
        %2041 = vmatpush1.msra.mxu0 0.0
        %2042 = vmatprep.subr.mxu0 0.0
        %2043 = vmatpush1.msra.mxu0 0.0
        %2044 = vmatprep.subr.mxu0 0.0
        %2045 = vmatpush1.msra.mxu0 0.0
        %2046 = vmatprep.subr.mxu0 0.0
        %2047 = vmatpush1.msra.mxu0 0.0
        %2048 = vmatprep.subr.mxu0 0.0
        %2049 = vmatpush1.msra.mxu0 0.0
        %2050 = vmatprep.subr.mxu0 0.0
        %2051 = vmatpush1.msra.mxu0 0.0
        %2052 = vmatprep.subr.mxu0 0.0
        %2053 = vmatpush1.msra.mxu0 0.0
        %2054 = vmatprep.subr.mxu0 0.0
        %2055 = vmatpush1.msra.mxu0 0.0
        %2056 = vmatprep.subr.mxu0 0.0
        %2057 = vmatpush1.msra.mxu0 0.0
        %2058 = vmatprep.subr.mxu0 0.0
        %2059 = vmatpush1.msra.mxu0 0.0
        %2060 = vmatprep.subr.mxu0 0.0
        %2061 = vmatpush1.msra.mxu0 0.0
        %2062 = vmatprep.subr.mxu0 0.0
        %2063 = vmatpush1.msra.mxu0 0.0
        %2064 = vmatprep.mubr.f32.mxu0 0.0
        %2065 = vmatmul.mubr.f32.gmra.mrb[0].mxu0 %v1995
        %v2066 = vpop.f32.mrb[0].mxu0
        %v2067 = vadd.f32 %v1991, %v2066
        %v2068 = vpop.f32.mrb[0].mxu0
        %2069 = vmatprep.mubr.f32.mxu0 0.0
        %2070 = vmatmul.mubr.f32.gmra.mrb[0].mxu0 %v1998
        %v2071 = vpop.f32.mrb[0].mxu0
        %v2072 = vadd.f32 %v1991, %v2071
        %v2073 = vpop.f32.mrb[0].mxu0
        %2074 = vdwg.mxu0
        %2075 = vst [vmem:[%s190] sm:$0xff] %v2067
        %2076 = vst [vmem:[%s190 + $0x8] sm:$0xff] %v2072
        %s2077 = sand.u32 %s115, 1
        %s2078 = scalar_lea.sflag [#allocation3], %s2077
        %s2079 = sand.u32 %s115, 1
        %s2080 = smul.addr %s2079, 16
        %s2081 = scalar_lea.vmem [#allocation2], %s2080
        // Predicated region
        $region37: #{tpu_custom_call.1} parent=35 // pred_check
          %p2082 = pneg %p125
        $region38: #{tpu_custom_call.1} parent=35 // pred_check_branch
          %2084 = sbr.rel (%p2082) target = $region40
        $region39: #{tpu_custom_call.1} parent=35 // pred_region
          %s2086 = ssub.s32 256, 256
          %2087 = vsyncadd %s2078, %s2086
          %s2088 = smul.addr %s18, 2
          %s2089 = smul.addr %s2088, 128
          %s2090 = scalar_lea.hbm %s4, %s2089
          %s2091 = sshll.u32 %s2081, 4
          %s2092 = int_to_ptr.vmem [resolvable:$true] %s2091
          %2097 = dma.vmem_to_hbm [thread:$0]  %s2092, 256, %s2090, %s2078, 128, 128, 8
        $region40: #{tpu_custom_call.1} parent=35 // pred_fallthru
          _
      $region36: #{tpu_custom_call.1} parent=5 // pred_fallthru
        _
      %p2098 = scmp.le.s32.totalorder 2, %s13
      // Predicated region
      $region41: #{tpu_custom_call.1} parent=5 // pred_check
        %p2099 = pneg %p2098
      $region42: #{tpu_custom_call.1} parent=5 // pred_check_branch
        %2101 = sbr.rel (%p2099) target = $region44
      $region43: #{tpu_custom_call.1} parent=5 // pred_region
        %s2102 = ssub.s32 %s13, 2
        // Predicated region
        $region45: #{tpu_custom_call.1} parent=43 // pred_check
          %p2103 = pneg %p131
        $region46: #{tpu_custom_call.1} parent=43 // pred_check_branch
          %2105 = sbr.rel (%p2103) target = $region48
        $region47: #{tpu_custom_call.1} parent=43 // pred_region
          %s2106 = sand.u32 %s116, 1
          %s2107 = scalar_lea.sflag [#allocation3], %s2106
          %s2108 = sand.u32 %s116, 1
          %s2109 = smul.addr %s2108, 16
          %s2110 = scalar_lea.vmem [#allocation2], %s2109
          %2111 = dma.done %s2107, 256
        $region48: #{tpu_custom_call.1} parent=43 // pred_fallthru
          _
      $region44: #{tpu_custom_call.1} parent=5 // pred_fallthru
        _
    $region6: #{tpu_custom_call.1} parent=1 // loop_footer
      %s17 = sadd.s32 1, %s13
    $region7: #{tpu_custom_call.1} parent=1 // loop_footer_branch
      %12 = sbr.rel target = $region3
    $region8: #{tpu_custom_call.1} parent=1 // loop_exit
      _
    %2112 = vsyncpa [#allocation3], 1
    %s2113 = scalar_lea.sflag [#allocation3], 1
    %2114 = vsyncpa %s2113, 1

</llo_original>
